<compile_context>
chip_gen: v6e
topology: v6e:2x2x1
jax: 0.10.0
libtpu: 0.0.40
codegen_flags: <defaults>
</compile_context>

<pallas_src>
import functools

import jax
import jax.numpy as jnp
from jax.experimental import pallas as pl
from jax.experimental.pallas import tpu as pltpu


# --------------------------------------------------------------------------- #
# Kernel
# --------------------------------------------------------------------------- #
def _gcn_gru_kernel(ain_ref, aout_ref, h_ref, w_ref,
                    cin_ref, cout_ref, bhh_ref, cgi_ref,
                    out_ref, *, step):
    Bt, n, H = h_ref.shape          # H is the lane-dense (padded) hidden size
    M = Bt * n
    G = 3 * H
    cdt = w_ref.dtype               # matmul operand dtype (bf16 or f32)

    # ---- loop-invariant loads / precomputation (hoisted out of the step loop) ----
    a_in = ain_ref[...]             # (Bt, n, n) already in compute dtype
    a_out = aout_ref[...]
    w = w_ref[...]                  # (H, 9H)  fused [edge_in->gate | edge_out->gate | w_hh]

    c_in = cin_ref[...].reshape(1, 1, G)      # f32
    c_out = cout_ref[...].reshape(1, 1, G)
    c_gi = cgi_ref[...].reshape(1, 1, G)

    # A_in @ (1 * c_in) == rowsum(A_in) * c_in  (exact), so the whole A-dependent
    # part of the gate-input bias is computed ONCE per block, not per step.
    row_in = jnp.sum(a_in.astype(jnp.float32), axis=2, keepdims=True)    # (Bt, n, 1)
    row_out = jnp.sum(a_out.astype(jnp.float32), axis=2, keepdims=True)
    gi_bias = (row_in * c_in + row_out * c_out + c_gi).reshape(M, G)     # (M, 3H) f32
    gh_bias = jnp.broadcast_to(bhh_ref[...], (M, G))                     # (M, 3H) f32

    bmm = (((2,), (1,)), ((0,), (0,)))
    h0 = h_ref[...].reshape(M, H)                                        # f32 state

    def body(_, h2):
        hc = h2.astype(cdt)
        # One fused node-wise matmul on the flattened (Bt*n, H) view: [qin|qout|gh].
        q = jnp.dot(hc, w, preferred_element_type=jnp.float32)           # (M, 9H)
        qin = q[:, :G].astype(cdt).reshape(Bt, n, G)
        qout = q[:, G:2 * G].astype(cdt).reshape(Bt, n, G)
        gh = q[:, 2 * G:] + gh_bias

        # Adjacency aggregation on the pre-split halves (no concat, no A slicing).
        gi = jax.lax.dot_general(a_in, qin, bmm, preferred_element_type=jnp.float32)
        gi = gi + jax.lax.dot_general(a_out, qout, bmm, preferred_element_type=jnp.float32)
        gi = gi.reshape(M, G) + gi_bias

        # GRU gate math in f32 (VPU/EUP).  All slices are 128-lane aligned.
        i_r, i_i, i_n = gi[:, :H], gi[:, H:2 * H], gi[:, 2 * H:]
        h_r, h_i, h_n = gh[:, :H], gh[:, H:2 * H], gh[:, 2 * H:]
        resetgate = jax.nn.sigmoid(i_r + h_r)
        inputgate = jax.nn.sigmoid(i_i + h_i)
        newgate = jnp.tanh(i_n + resetgate * h_n)
        return newgate + inputgate * (h2 - newgate)

    h = jax.lax.fori_loop(0, step, body, h0, unroll=step <= 4)
    out_ref[...] = h.reshape(Bt, n, H).astype(out_ref.dtype)


# --------------------------------------------------------------------------- #
# Padding / tiling helpers
# --------------------------------------------------------------------------- #
def _round_up(x, m):
    return ((x + m - 1) // m) * m


def _pad_axis(x, axis, new):
    old = x.shape[axis]
    if old == new:
        return x
    pad = [(0, 0)] * x.ndim
    pad[axis] = (0, new - old)
    return jnp.pad(x, pad)


def _pad_gate_cols(x, H, Hp):
    """(..., 3H) -> (..., 3Hp): pad each of the r/i/n blocks individually."""
    if H == Hp:
        return x
    r, i, n = jnp.split(x, 3, axis=-1)
    return jnp.concatenate([_pad_axis(p, -1, Hp) for p in (r, i, n)], axis=-1)


def _vmem_capacity_bytes():
    try:
        cap = getattr(pltpu.get_tpu_info(), "vmem_capacity_bytes", None)
        if cap:
            return int(cap)
    except Exception:
        pass
    return 64 << 20   # conservative floor (v7x per-TensorCore VMEM)


def _block_vmem_bytes(bt, n, Hp, cds):
    """Rough per-grid-step VMEM footprint: double-buffered blocks + live temps."""
    G = 3 * Hp
    M = bt * n
    a_blk = bt * n * n * cds
    h_blk = bt * n * Hp * 4
    io = 2 * (2 * a_blk + 2 * h_blk)                    # A_in, A_out, hidden, out (x2 buffers)
    weights = 2 * (Hp * 3 * G * cds + 4 * G * 4)        # fused W + bias rows (x2 buffers)
    temps = M * (3 * G * 4 + 2 * G * cds + 4 * G * 4 + 6 * Hp * 4)
    return io + weights + temps


def _pick_block_b(B, n, Hp, cds, budget):
    """Largest divisor of B whose VMEM working set fits `budget`.

    If a block that both fills the MXU M dimension (bt*n >= 256) and still
    leaves >= 2 grid iterations fits, prefer it (keeps both v7x TensorCores
    busy); single-TC chips just get the largest fitting block.
    """
    divisors = [d for d in range(1, B + 1) if B % d == 0]
    fits = [d for d in divisors if _block_vmem_bytes(d, n, Hp, cds) <= budget]
    if not fits:
        return 1
    multi = [d for d in fits if B // d >= 2 and d * n >= 256]
    return max(multi) if multi else max(fits)


# --------------------------------------------------------------------------- #
# Wrapper
# --------------------------------------------------------------------------- #
def _gcn_gru_pallas(A, hidden, params, *, step, block_b, compute_dtype):
    B, n, H = hidden.shape
    assert A.shape == (B, n, 2 * n)

    # --- exact algebraic folding of the edge linears into the gate-input path ---
    w_ih_t = params["w_ih_t"]                          # (2H, 3H)
    W1, W2 = w_ih_t[:H, :], w_ih_t[H:, :]
    w_in_f = params["w_ein_t"] @ W1                    # (H, 3H)
    w_out_f = params["w_eout_t"] @ W2                  # (H, 3H)
    w_hh = params["w_hh_t"]                            # (H, 3H)
    c_in = params["b_ein"] @ W1                        # (1, 3H)
    c_out = params["b_eout"] @ W2                      # (1, 3H)
    c_gi = params["b_iah"] @ W1 + params["b_oah"] @ W2 + params["b_ih"]   # (1, 3H)
    b_hh = params["b_hh"]                              # (1, 3H)

    # --- lane-dense padding: H -> multiple of 128, n -> multiple of 8 ---
    Hp = max(128, _round_up(H, 128))
    n_p = _round_up(n, 8)
    G = 3 * Hp

    def pad_w(w):  # (H, 3H) -> (Hp, 3Hp), zero padding (exact: padded lanes stay 0)
        return _pad_axis(_pad_gate_cols(w, H, Hp), 0, Hp)

    w_fused = jnp.concatenate([pad_w(w_in_f), pad_w(w_out_f), pad_w(w_hh)],
                              axis=1).astype(compute_dtype)               # (Hp, 9Hp)
    c_in_p = _pad_gate_cols(c_in, H, Hp)
    c_out_p = _pad_gate_cols(c_out, H, Hp)
    c_gi_p = _pad_gate_cols(c_gi, H, Hp)
    b_hh_p = _pad_gate_cols(b_hh, H, Hp)

    hidden_p = _pad_axis(_pad_axis(hidden, 2, Hp), 1, n_p)                # (B, n_p, Hp) f32
    # Pre-split, pre-cast adjacency (dominant DMA input) -> half the bytes in bf16.
    a_in = _pad_axis(_pad_axis(A[:, :, :n], 2, n_p), 1, n_p).astype(compute_dtype)
    a_out = _pad_axis(_pad_axis(A[:, :, n:2 * n], 2, n_p), 1, n_p).astype(compute_dtype)

    # --- VMEM-budgeted batch tile (per generation) ---
    cds = jnp.dtype(compute_dtype).itemsize
    cap = _vmem_capacity_bytes()
    if block_b is None:
        bt = _pick_block_b(B, n_p, Hp, cds, budget=int(cap * 0.6))
    else:
        if B % block_b != 0:
            raise ValueError(f"block_b={block_b} must divide batch size {B}")
        bt = block_b
    grid = (B // bt,)

    flops = step * (2 * B * n_p * Hp * 3 * G + 2 * 2 * B * n_p * n_p * G)
    transcendentals = step * 3 * B * n_p * Hp
    bytes_accessed = ((a_in.size + a_out.size) * cds + 2 * hidden_p.size * 4
                      + w_fused.size * cds + 4 * G * 4)

    kernel = functools.partial(_gcn_gru_kernel, step=step)
    full = lambda shape: pl.BlockSpec(shape, lambda b: (0,) * len(shape))

    out_p = pl.pallas_call(
        kernel,
        out_shape=jax.ShapeDtypeStruct((B, n_p, Hp), hidden.dtype),
        grid=grid,
        in_specs=[
            pl.BlockSpec((bt, n_p, n_p), lambda b: (b, 0, 0)),   # A_in
            pl.BlockSpec((bt, n_p, n_p), lambda b: (b, 0, 0)),   # A_out
            pl.BlockSpec((bt, n_p, Hp), lambda b: (b, 0, 0)),    # hidden
            full((Hp, 3 * G)),    # fused node-wise weights [W_in|W_out|W_hh]
            full((1, G)),         # c_in  (edge-in bias folded through W1)
            full((1, G)),         # c_out (edge-out bias folded through W2)
            full((1, G)),         # b_hh
            full((1, G)),         # c_gi  (b_iah W1 + b_oah W2 + b_ih)
        ],
        out_specs=pl.BlockSpec((bt, n_p, Hp), lambda b: (b, 0, 0)),
        compiler_params=pltpu.CompilerParams(
            dimension_semantics=("parallel",),
            vmem_limit_bytes=int(cap * 0.85)),
        cost_estimate=pl.CostEstimate(flops=flops,
                                      transcendentals=transcendentals,
                                      bytes_accessed=bytes_accessed),
    )(a_in, a_out, hidden_p, w_fused, c_in_p, c_out_p, b_hh_p, c_gi_p)

    return out_p[:, :n, :H]


@functools.partial(jax.jit, static_argnames=("step", "block_b", "use_bf16_matmul"))
def gcn_gru_forward(A, hidden, params, step=1, block_b=None, use_bf16_matmul=True):
    """Pallas GCN_GRU.forward.  bf16 matmul operands (native MXU rate on v5e/v6e/v7x)
    with f32 accumulation and f32 gate math by default; bf16 error compounds with
    `step` -- pass use_bf16_matmul=False for a bit-faithful f32 path."""
    compute_dtype = jnp.bfloat16 if use_bf16_matmul else jnp.float32
    return _gcn_gru_pallas(A, hidden, params, step=step, block_b=block_b,
                           compute_dtype=compute_dtype)


# --------------------------------------------------------------------------- #
# Pure-JAX reference (mirrors the PyTorch module exactly) + params
# --------------------------------------------------------------------------- #
def gcn_gru_reference(A, hidden, params, step=1):
    n = A.shape[1]
    for _ in range(step):
        ein = hidden @ params["w_ein_t"] + params["b_ein"]
        eout = hidden @ params["w_eout_t"] + params["b_eout"]
        input_in = jnp.matmul(A[:, :, :n], ein) + params["b_iah"]
        input_out = jnp.matmul(A[:, :, n:2 * n], eout) + params["b_oah"]
        inputs = jnp.concatenate([input_in, input_out], axis=2)
        gi = inputs @ params["w_ih_t"] + params["b_ih"]
        gh = hidden @ params["w_hh_t"] + params["b_hh"]
        i_r, i_i, i_n = jnp.split(gi, 3, axis=-1)
        h_r, h_i, h_n = jnp.split(gh, 3, axis=-1)
        resetgate = jax.nn.sigmoid(i_r + h_r)
        inputgate = jax.nn.sigmoid(i_i + h_i)
        newgate = jnp.tanh(i_n + resetgate * h_n)
        hidden = newgate + inputgate * (hidden - newgate)
    return hidden


def init_params(key, hidden_size):
    H = hidden_size
    ks = jax.random.split(key, 10)
    s = 1.0 / jnp.sqrt(H)
    return {
        # gate weights, stored pre-transposed (in, out)
        "w_ih_t": jax.random.uniform(ks[0], (2 * H, 3 * H), jnp.float32, -s, s),
        "w_hh_t": jax.random.uniform(ks[1], (H, 3 * H), jnp.float32, -s, s),
        "b_ih": jax.random.uniform(ks[2], (1, 3 * H), jnp.float32, -s, s),
        "b_hh": jax.random.uniform(ks[3], (1, 3 * H), jnp.float32, -s, s),
        "b_iah": jax.random.uniform(ks[4], (1, H), jnp.float32, -s, s),
        "b_oah": jax.random.uniform(ks[5], (1, H), jnp.float32, -s, s),
        # edge linears (nn.Linear): y = x @ W^T + b, stored as W^T = (in, out)
        "w_ein_t": jax.random.uniform(ks[6], (H, H), jnp.float32, -s, s),
        "b_ein": jax.random.uniform(ks[7], (1, H), jnp.float32, -s, s),
        "w_eout_t": jax.random.uniform(ks[8], (H, H), jnp.float32, -s, s),
        "b_eout": jax.random.uniform(ks[9], (1, H), jnp.float32, -s, s),
    }
    # NOTE: linear_edge_f exists in the PyTorch module but is unused in forward().


if __name__ == "__main__":
    B, n, H = 2, 16, 32
    step = 2

    key = jax.random.PRNGKey(0)
    k_a, k_h, k_p = jax.random.split(key, 3)

    A = jax.random.uniform(k_a, (B, n, 2 * n), jnp.float32)       # (batch, n, 2n)
    hidden = jax.random.normal(k_h, (B, n, H), jnp.float32)       # (batch, n, H)
    params = init_params(k_p, H)

    ref = gcn_gru_reference(A, hidden, params, step=step)

    # f32 MXU path: tight correctness check against the faithful reference.
    out_f32 = jax.block_until_ready(
        gcn_gru_forward(A, hidden, params, step=step, use_bf16_matmul=False))
    assert out_f32.shape == ref.shape == (B, n, H)
    err_f32 = float(jnp.max(jnp.abs(out_f32 - ref)))
    assert jnp.allclose(out_f32, ref, atol=1e-3, rtol=1e-3), err_f32

    # bf16-operand fast path (A/weights/h in bf16, f32 accumulation + f32 gates).
    out_bf16 = jax.block_until_ready(
        gcn_gru_forward(A, hidden, params, step=step, use_bf16_matmul=True))
    err_bf16 = float(jnp.max(jnp.abs(out_bf16 - ref)))
    assert jnp.allclose(out_bf16, ref, atol=1.5e-1, rtol=1.5e-1), err_bf16

    print("KERNEL_OK")
</pallas_src>

<mosaic_0001>
module attributes {stable_mosaic.version = 11 : i64} {
  func.func @_gcn_gru_kernel(%arg0: i32, %arg1: memref<2x16x16xf32, #tpu.memory_space<vmem>>, %arg2: memref<2x16x16xf32, #tpu.memory_space<vmem>>, %arg3: memref<2x16x128xf32, #tpu.memory_space<vmem>>, %arg4: memref<128x1152xf32, #tpu.memory_space<vmem>>, %arg5: memref<1x384xf32, #tpu.memory_space<vmem>>, %arg6: memref<1x384xf32, #tpu.memory_space<vmem>>, %arg7: memref<1x384xf32, #tpu.memory_space<vmem>>, %arg8: memref<1x384xf32, #tpu.memory_space<vmem>>, %arg9: memref<2x16x128xf32, #tpu.memory_space<vmem>>) attributes {dimension_semantics = [#tpu.dimension_semantics<parallel>], iteration_bounds = array<i64: 1>, scalar_prefetch = 0 : i64, scratch_operands = 0 : i64, tpu.core_type = #tpu.core_type<tc>, window_params = [{transform_indices = @transform_0, window_bounds = array<i64: 2, 16, 16>}, {transform_indices = @transform_1, window_bounds = array<i64: 2, 16, 16>}, {transform_indices = @transform_2, window_bounds = array<i64: 2, 16, 128>}, {pipeline_mode = #tpu.pipeline_mode<synchronous>, transform_indices = @transform_3, window_bounds = array<i64: 128, 1152>}, {pipeline_mode = #tpu.pipeline_mode<synchronous>, transform_indices = @transform_4, window_bounds = array<i64: 1, 384>}, {pipeline_mode = #tpu.pipeline_mode<synchronous>, transform_indices = @transform_5, window_bounds = array<i64: 1, 384>}, {pipeline_mode = #tpu.pipeline_mode<synchronous>, transform_indices = @transform_6, window_bounds = array<i64: 1, 384>}, {pipeline_mode = #tpu.pipeline_mode<synchronous>, transform_indices = @transform_7, window_bounds = array<i64: 1, 384>}, {transform_indices = @transform_8, window_bounds = array<i64: 2, 16, 128>}]} {
    %c0 = arith.constant 0 : index
    %c0_0 = arith.constant 0 : index
    %c0_1 = arith.constant 0 : index
    %0 = vector.load %arg1[%c0, %c0_0, %c0_1] : memref<2x16x16xf32, #tpu.memory_space<vmem>>, vector<2x16x16xf32>
    %c0_2 = arith.constant 0 : index
    %c0_3 = arith.constant 0 : index
    %c0_4 = arith.constant 0 : index
    %1 = vector.load %arg2[%c0_2, %c0_3, %c0_4] : memref<2x16x16xf32, #tpu.memory_space<vmem>>, vector<2x16x16xf32>
    %c0_5 = arith.constant 0 : index
    %c0_6 = arith.constant 0 : index
    %2 = vector.load %arg4[%c0_5, %c0_6] : memref<128x1152xf32, #tpu.memory_space<vmem>>, vector<128x1152xf32>
    %c0_7 = arith.constant 0 : index
    %c0_8 = arith.constant 0 : index
    %3 = vector.load %arg5[%c0_7, %c0_8] : memref<1x384xf32, #tpu.memory_space<vmem>>, vector<1x384xf32>
    %4 = vector.shape_cast %3 : vector<1x384xf32> to vector<1x1x384xf32>
    %c0_9 = arith.constant 0 : index
    %c0_10 = arith.constant 0 : index
    %5 = vector.load %arg6[%c0_9, %c0_10] : memref<1x384xf32, #tpu.memory_space<vmem>>, vector<1x384xf32>
    %6 = vector.shape_cast %5 : vector<1x384xf32> to vector<1x1x384xf32>
    %c0_11 = arith.constant 0 : index
    %c0_12 = arith.constant 0 : index
    %7 = vector.load %arg8[%c0_11, %c0_12] : memref<1x384xf32, #tpu.memory_space<vmem>>, vector<1x384xf32>
    %8 = vector.shape_cast %7 : vector<1x384xf32> to vector<1x1x384xf32>
    %cst = arith.constant dense<0.000000e+00> : vector<2x16xf32>
    %9 = vector.multi_reduction <add>, %0, %cst [2] : vector<2x16x16xf32> to vector<2x16xf32>
    %10 = vector.shape_cast %9 : vector<2x16xf32> to vector<2x16x1xf32>
    %cst_13 = arith.constant dense<0.000000e+00> : vector<2x16xf32>
    %11 = vector.multi_reduction <add>, %1, %cst_13 [2] : vector<2x16x16xf32> to vector<2x16xf32>
    %12 = vector.shape_cast %11 : vector<2x16xf32> to vector<2x16x1xf32>
    %13 = vector.broadcast %10 : vector<2x16x1xf32> to vector<2x16x384xf32>
    %14 = vector.broadcast %4 : vector<1x1x384xf32> to vector<2x16x384xf32>
    %15 = arith.mulf %13, %14 : vector<2x16x384xf32>
    %16 = vector.broadcast %12 : vector<2x16x1xf32> to vector<2x16x384xf32>
    %17 = vector.broadcast %6 : vector<1x1x384xf32> to vector<2x16x384xf32>
    %18 = arith.mulf %16, %17 : vector<2x16x384xf32>
    %19 = arith.addf %15, %18 : vector<2x16x384xf32>
    %20 = vector.broadcast %8 : vector<1x1x384xf32> to vector<2x16x384xf32>
    %21 = arith.addf %19, %20 : vector<2x16x384xf32>
    %22 = vector.shape_cast %21 : vector<2x16x384xf32> to vector<32x384xf32>
    %c0_14 = arith.constant 0 : index
    %c0_15 = arith.constant 0 : index
    %23 = vector.load %arg7[%c0_14, %c0_15] : memref<1x384xf32, #tpu.memory_space<vmem>>, vector<1x384xf32>
    %24 = vector.shape_cast %23 : vector<1x384xf32> to vector<1x384xf32>
    %25 = vector.broadcast %24 : vector<1x384xf32> to vector<32x384xf32>
    %c0_16 = arith.constant 0 : index
    %c0_17 = arith.constant 0 : index
    %c0_18 = arith.constant 0 : index
    %26 = vector.load %arg3[%c0_16, %c0_17, %c0_18] : memref<2x16x128xf32, #tpu.memory_space<vmem>>, vector<2x16x128xf32>
    %27 = vector.shape_cast %26 : vector<2x16x128xf32> to vector<32x128xf32>
    %c0_i32 = arith.constant 0 : i32
    %cst_19 = arith.constant dense<0.000000e+00> : vector<32x1152xf32>
    %28 = tpu.matmul %27, %2, %cst_19 {dimension_numbers = #tpu.dot_dimension_numbers<[1], [0], [0], [1], [0, 0, 1, 1], [], []>} : vector<32x128xf32>, vector<128x1152xf32>, vector<32x1152xf32> -> vector<32x1152xf32>
    %29 = vector.extract_strided_slice %28 {offsets = [0, 0], sizes = [32, 384], strides = [1, 1]} : vector<32x1152xf32> to vector<32x384xf32>
    %30 = vector.shape_cast %29 : vector<32x384xf32> to vector<2x16x384xf32>
    %31 = vector.extract_strided_slice %28 {offsets = [0, 384], sizes = [32, 384], strides = [1, 1]} : vector<32x1152xf32> to vector<32x384xf32>
    %32 = vector.shape_cast %31 : vector<32x384xf32> to vector<2x16x384xf32>
    %33 = vector.extract_strided_slice %28 {offsets = [0, 768], sizes = [32, 384], strides = [1, 1]} : vector<32x1152xf32> to vector<32x384xf32>
    %34 = arith.addf %33, %25 : vector<32x384xf32>
    %cst_20 = arith.constant dense<0.000000e+00> : vector<2x16x384xf32>
    %35 = tpu.matmul %0, %30, %cst_20 {dimension_numbers = #tpu.dot_dimension_numbers<[2], [1], [1], [2], [0, 0, 0, 1, 1, 2], [0], [0]>} : vector<2x16x16xf32>, vector<2x16x384xf32>, vector<2x16x384xf32> -> vector<2x16x384xf32>
    %cst_21 = arith.constant dense<0.000000e+00> : vector<2x16x384xf32>
    %36 = tpu.matmul %1, %32, %cst_21 {dimension_numbers = #tpu.dot_dimension_numbers<[2], [1], [1], [2], [0, 0, 0, 1, 1, 2], [0], [0]>} : vector<2x16x16xf32>, vector<2x16x384xf32>, vector<2x16x384xf32> -> vector<2x16x384xf32>
    %37 = arith.addf %35, %36 : vector<2x16x384xf32>
    %38 = vector.shape_cast %37 : vector<2x16x384xf32> to vector<32x384xf32>
    %39 = arith.addf %38, %22 : vector<32x384xf32>
    %40 = vector.extract_strided_slice %39 {offsets = [0, 0], sizes = [32, 128], strides = [1, 1]} : vector<32x384xf32> to vector<32x128xf32>
    %41 = vector.extract_strided_slice %39 {offsets = [0, 128], sizes = [32, 128], strides = [1, 1]} : vector<32x384xf32> to vector<32x128xf32>
    %42 = vector.extract_strided_slice %39 {offsets = [0, 256], sizes = [32, 128], strides = [1, 1]} : vector<32x384xf32> to vector<32x128xf32>
    %43 = vector.extract_strided_slice %34 {offsets = [0, 0], sizes = [32, 128], strides = [1, 1]} : vector<32x384xf32> to vector<32x128xf32>
    %44 = vector.extract_strided_slice %34 {offsets = [0, 128], sizes = [32, 128], strides = [1, 1]} : vector<32x384xf32> to vector<32x128xf32>
    %45 = vector.extract_strided_slice %34 {offsets = [0, 256], sizes = [32, 128], strides = [1, 1]} : vector<32x384xf32> to vector<32x128xf32>
    %46 = arith.addf %40, %43 : vector<32x128xf32>
    %47 = arith.negf %46 : vector<32x128xf32>
    %48 = math.exp %47 : vector<32x128xf32>
    %cst_22 = arith.constant 1.000000e+00 : f32
    %49 = vector.broadcast %cst_22 : f32 to vector<32x128xf32>
    %50 = arith.addf %49, %48 : vector<32x128xf32>
    %51 = arith.divf %49, %50 : vector<32x128xf32>
    %52 = arith.addf %41, %44 : vector<32x128xf32>
    %53 = arith.negf %52 : vector<32x128xf32>
    %54 = math.exp %53 : vector<32x128xf32>
    %cst_23 = arith.constant 1.000000e+00 : f32
    %55 = vector.broadcast %cst_23 : f32 to vector<32x128xf32>
    %56 = arith.addf %55, %54 : vector<32x128xf32>
    %57 = arith.divf %55, %56 : vector<32x128xf32>
    %58 = arith.mulf %51, %45 : vector<32x128xf32>
    %59 = arith.addf %42, %58 : vector<32x128xf32>
    %60 = math.tanh %59 : vector<32x128xf32>
    %61 = arith.subf %27, %60 : vector<32x128xf32>
    %62 = arith.mulf %57, %61 : vector<32x128xf32>
    %63 = arith.addf %60, %62 : vector<32x128xf32>
    %c1_i32 = arith.constant 1 : i32
    %cst_24 = arith.constant dense<0.000000e+00> : vector<32x1152xf32>
    %64 = tpu.matmul %63, %2, %cst_24 {dimension_numbers = #tpu.dot_dimension_numbers<[1], [0], [0], [1], [0, 0, 1, 1], [], []>} : vector<32x128xf32>, vector<128x1152xf32>, vector<32x1152xf32> -> vector<32x1152xf32>
    %65 = vector.extract_strided_slice %64 {offsets = [0, 0], sizes = [32, 384], strides = [1, 1]} : vector<32x1152xf32> to vector<32x384xf32>
    %66 = vector.shape_cast %65 : vector<32x384xf32> to vector<2x16x384xf32>
    %67 = vector.extract_strided_slice %64 {offsets = [0, 384], sizes = [32, 384], strides = [1, 1]} : vector<32x1152xf32> to vector<32x384xf32>
    %68 = vector.shape_cast %67 : vector<32x384xf32> to vector<2x16x384xf32>
    %69 = vector.extract_strided_slice %64 {offsets = [0, 768], sizes = [32, 384], strides = [1, 1]} : vector<32x1152xf32> to vector<32x384xf32>
    %70 = arith.addf %69, %25 : vector<32x384xf32>
    %cst_25 = arith.constant dense<0.000000e+00> : vector<2x16x384xf32>
    %71 = tpu.matmul %0, %66, %cst_25 {dimension_numbers = #tpu.dot_dimension_numbers<[2], [1], [1], [2], [0, 0, 0, 1, 1, 2], [0], [0]>} : vector<2x16x16xf32>, vector<2x16x384xf32>, vector<2x16x384xf32> -> vector<2x16x384xf32>
    %cst_26 = arith.constant dense<0.000000e+00> : vector<2x16x384xf32>
    %72 = tpu.matmul %1, %68, %cst_26 {dimension_numbers = #tpu.dot_dimension_numbers<[2], [1], [1], [2], [0, 0, 0, 1, 1, 2], [0], [0]>} : vector<2x16x16xf32>, vector<2x16x384xf32>, vector<2x16x384xf32> -> vector<2x16x384xf32>
    %73 = arith.addf %71, %72 : vector<2x16x384xf32>
    %74 = vector.shape_cast %73 : vector<2x16x384xf32> to vector<32x384xf32>
    %75 = arith.addf %74, %22 : vector<32x384xf32>
    %76 = vector.extract_strided_slice %75 {offsets = [0, 0], sizes = [32, 128], strides = [1, 1]} : vector<32x384xf32> to vector<32x128xf32>
    %77 = vector.extract_strided_slice %75 {offsets = [0, 128], sizes = [32, 128], strides = [1, 1]} : vector<32x384xf32> to vector<32x128xf32>
    %78 = vector.extract_strided_slice %75 {offsets = [0, 256], sizes = [32, 128], strides = [1, 1]} : vector<32x384xf32> to vector<32x128xf32>
    %79 = vector.extract_strided_slice %70 {offsets = [0, 0], sizes = [32, 128], strides = [1, 1]} : vector<32x384xf32> to vector<32x128xf32>
    %80 = vector.extract_strided_slice %70 {offsets = [0, 128], sizes = [32, 128], strides = [1, 1]} : vector<32x384xf32> to vector<32x128xf32>
    %81 = vector.extract_strided_slice %70 {offsets = [0, 256], sizes = [32, 128], strides = [1, 1]} : vector<32x384xf32> to vector<32x128xf32>
    %82 = arith.addf %76, %79 : vector<32x128xf32>
    %83 = arith.negf %82 : vector<32x128xf32>
    %84 = math.exp %83 : vector<32x128xf32>
    %cst_27 = arith.constant 1.000000e+00 : f32
    %85 = vector.broadcast %cst_27 : f32 to vector<32x128xf32>
    %86 = arith.addf %85, %84 : vector<32x128xf32>
    %87 = arith.divf %85, %86 : vector<32x128xf32>
    %88 = arith.addf %77, %80 : vector<32x128xf32>
    %89 = arith.negf %88 : vector<32x128xf32>
    %90 = math.exp %89 : vector<32x128xf32>
    %cst_28 = arith.constant 1.000000e+00 : f32
    %91 = vector.broadcast %cst_28 : f32 to vector<32x128xf32>
    %92 = arith.addf %91, %90 : vector<32x128xf32>
    %93 = arith.divf %91, %92 : vector<32x128xf32>
    %94 = arith.mulf %87, %81 : vector<32x128xf32>
    %95 = arith.addf %78, %94 : vector<32x128xf32>
    %96 = math.tanh %95 : vector<32x128xf32>
    %97 = arith.subf %63, %96 : vector<32x128xf32>
    %98 = arith.mulf %93, %97 : vector<32x128xf32>
    %99 = arith.addf %96, %98 : vector<32x128xf32>
    %100 = vector.shape_cast %99 : vector<32x128xf32> to vector<2x16x128xf32>
    %c0_29 = arith.constant 0 : index
    %c0_30 = arith.constant 0 : index
    %c0_31 = arith.constant 0 : index
    %101 = vector.load %arg9[%c0_29, %c0_30, %c0_31] : memref<2x16x128xf32, #tpu.memory_space<vmem>>, vector<2x16x128xf32>
    tpu.vector_store %arg9[%c0_29, %c0_30, %c0_31], %100 {strides = array<i32>} : memref<2x16x128xf32, #tpu.memory_space<vmem>>, vector<2x16x128xf32>,
    return
  }
  func.func @transform_0(%arg0: i32) -> (i32, i32, i32) {
    %c0_i32 = arith.constant 0 : i32
    %c0_i32_0 = arith.constant 0 : i32
    %c0_i32_1 = arith.constant 0 : i32
    return %arg0, %c0_i32, %c0_i32_0 : i32, i32, i32
  }
  func.func @transform_1(%arg0: i32) -> (i32, i32, i32) {
    %c0_i32 = arith.constant 0 : i32
    %c0_i32_0 = arith.constant 0 : i32
    %c0_i32_1 = arith.constant 0 : i32
    return %arg0, %c0_i32, %c0_i32_0 : i32, i32, i32
  }
  func.func @transform_2(%arg0: i32) -> (i32, i32, i32) {
    %c0_i32 = arith.constant 0 : i32
    %c0_i32_0 = arith.constant 0 : i32
    %c0_i32_1 = arith.constant 0 : i32
    return %arg0, %c0_i32, %c0_i32_0 : i32, i32, i32
  }
  func.func @transform_3(%arg0: i32) -> (i32, i32) {
    %c0_i32 = arith.constant 0 : i32
    %c0_i32_0 = arith.constant 0 : i32
    %c0_i32_1 = arith.constant 0 : i32
    return %c0_i32, %c0_i32_0 : i32, i32
  }
  func.func @transform_4(%arg0: i32) -> (i32, i32) {
    %c0_i32 = arith.constant 0 : i32
    %c0_i32_0 = arith.constant 0 : i32
    %c0_i32_1 = arith.constant 0 : i32
    return %c0_i32, %c0_i32_0 : i32, i32
  }
  func.func @transform_5(%arg0: i32) -> (i32, i32) {
    %c0_i32 = arith.constant 0 : i32
    %c0_i32_0 = arith.constant 0 : i32
    %c0_i32_1 = arith.constant 0 : i32
    return %c0_i32, %c0_i32_0 : i32, i32
  }
  func.func @transform_6(%arg0: i32) -> (i32, i32) {
    %c0_i32 = arith.constant 0 : i32
    %c0_i32_0 = arith.constant 0 : i32
    %c0_i32_1 = arith.constant 0 : i32
    return %c0_i32, %c0_i32_0 : i32, i32
  }
  func.func @transform_7(%arg0: i32) -> (i32, i32) {
    %c0_i32 = arith.constant 0 : i32
    %c0_i32_0 = arith.constant 0 : i32
    %c0_i32_1 = arith.constant 0 : i32
    return %c0_i32, %c0_i32_0 : i32, i32
  }
  func.func @transform_8(%arg0: i32) -> (i32, i32, i32) {
    %c0_i32 = arith.constant 0 : i32
    %c0_i32_0 = arith.constant 0 : i32
    %c0_i32_1 = arith.constant 0 : i32
    return %arg0, %c0_i32, %c0_i32_0 : i32, i32, i32
  }
}

</mosaic_0001>

<llo_original>
// kernel: gcn_gru_forward.1
$region0: #{gcn_gru_forward.1}
  #allocation0 [shape = 'u32[]', space=smem, size = 0x4, offset = 0x4, fixed_abs, tag = 'smem constant byte address 0x4 - core index']
  #allocation1 [shape = 'u32[144,128]{1,0:T(1,128)}', space=vmem, size = 0x12000, scoped, tag = 'internal scratch']
  %s0 = inlined_call_operand.vmem [shape: f32[2,16,16], index: 0, kind: input, shape index: {}]
  %s1 = inlined_call_operand.vmem [shape: f32[2,16,16], index: 1, kind: input, shape index: {}]
  %s2 = inlined_call_operand.vmem [shape: f32[2,16,128], index: 2, kind: input, shape index: {}]
  %s3 = inlined_call_operand.vmem [shape: f32[128,1152], index: 3, kind: input, shape index: {}]
  %s4 = inlined_call_operand.vmem [shape: f32[1,384], index: 4, kind: input, shape index: {}]
  %s5 = inlined_call_operand.vmem [shape: f32[1,384], index: 5, kind: input, shape index: {}]
  %s6 = inlined_call_operand.vmem [shape: f32[1,384], index: 6, kind: input, shape index: {}]
  %s7 = inlined_call_operand.vmem [shape: f32[1,384], index: 7, kind: input, shape index: {}]
  %s8 = inlined_call_operand.hbm [shape: f32[2,16,128], index: 8, kind: output, shape index: {}]
  %s9 = sld [smem:[#allocation0]]
  $region42: #{gcn_gru_forward.1} parent=0
    _
  %s11 = ssub.s32 1, %s9
  %s12 = scalar_select 0, %s11, %s9
  $region1: #{gcn_gru_forward.1} parent=0
    #allocation2 [shape = 'u8[16384]{0}', space=vmem, size = 0x4000, scoped, tag = 'output window, operand 0, single buffered']
    #allocation3 [shape = 's32[1]{0}', space=sflag, size = 0x4, scoped, tag = 'scoped memory for gcn_gru_forward.1']
    %13 = vsyncpa [#allocation3], 0
    // Predicated region
    $region2: #{gcn_gru_forward.1} parent=1 // pred_check
      _
    $region3: #{gcn_gru_forward.1} parent=1 // pred_check_branch
      %15 = sbr.rel (0) target = $region5
    $region4: #{gcn_gru_forward.1} parent=1 // pred_region
      _
    $region5: #{gcn_gru_forward.1} parent=1 // pred_fallthru
      _
    // Predicated region
    $region6: #{gcn_gru_forward.1} parent=1 // pred_check
      _
    $region7: #{gcn_gru_forward.1} parent=1 // pred_check_branch
      %17 = sbr.rel (0) target = $region9
    $region8: #{gcn_gru_forward.1} parent=1 // pred_region
      _
    $region9: #{gcn_gru_forward.1} parent=1 // pred_fallthru
      _
    // Predicated region
    $region10: #{gcn_gru_forward.1} parent=1 // pred_check
      _
    $region11: #{gcn_gru_forward.1} parent=1 // pred_check_branch
      %19 = sbr.rel (0) target = $region13
    $region12: #{gcn_gru_forward.1} parent=1 // pred_region
      _
    $region13: #{gcn_gru_forward.1} parent=1 // pred_fallthru
      _
    // Predicated region
    $region14: #{gcn_gru_forward.1} parent=1 // pred_check
      _
    $region15: #{gcn_gru_forward.1} parent=1 // pred_check_branch
      %21 = sbr.rel (0) target = $region17
    $region16: #{gcn_gru_forward.1} parent=1 // pred_region
      _
    $region17: #{gcn_gru_forward.1} parent=1 // pred_fallthru
      _
    // Predicated region
    $region18: #{gcn_gru_forward.1} parent=1 // pred_check
      _
    $region19: #{gcn_gru_forward.1} parent=1 // pred_check_branch
      %23 = sbr.rel (0) target = $region21
    $region20: #{gcn_gru_forward.1} parent=1 // pred_region
      _
    $region21: #{gcn_gru_forward.1} parent=1 // pred_fallthru
      _
    // Predicated region
    $region22: #{gcn_gru_forward.1} parent=1 // pred_check
      _
    $region23: #{gcn_gru_forward.1} parent=1 // pred_check_branch
      %25 = sbr.rel (0) target = $region25
    $region24: #{gcn_gru_forward.1} parent=1 // pred_region
      _
    $region25: #{gcn_gru_forward.1} parent=1 // pred_fallthru
      _
    // Predicated region
    $region26: #{gcn_gru_forward.1} parent=1 // pred_check
      _
    $region27: #{gcn_gru_forward.1} parent=1 // pred_check_branch
      %27 = sbr.rel (0) target = $region29
    $region28: #{gcn_gru_forward.1} parent=1 // pred_region
      _
    $region29: #{gcn_gru_forward.1} parent=1 // pred_fallthru
      _
    // Predicated region
    $region30: #{gcn_gru_forward.1} parent=1 // pred_check
      _
    $region31: #{gcn_gru_forward.1} parent=1 // pred_check_branch
      %29 = sbr.rel (0) target = $region33
    $region32: #{gcn_gru_forward.1} parent=1 // pred_region
      _
    $region33: #{gcn_gru_forward.1} parent=1 // pred_fallthru
      _
    %v30 = vld [vmem:[%s0] sm:$0xff]
    %v31 = vld [vmem:[%s0 + $0x8] sm:$0xff]
    %v32 = vld [vmem:[%s0 + $0x10] sm:$0xff]
    %v33 = vld [vmem:[%s0 + $0x18] sm:$0xff]
    %v34 = vld [vmem:[%s1] sm:$0xff]
    %v35 = vld [vmem:[%s1 + $0x8] sm:$0xff]
    %v36 = vld [vmem:[%s1 + $0x10] sm:$0xff]
    %v37 = vld [vmem:[%s1 + $0x18] sm:$0xff]
    %v38 = vld [vmem:[%s3] sm:$0xff]
    %v39 = vld [vmem:[%s3 + $0x8] sm:$0xff]
    %v40 = vld [vmem:[%s3 + $0x10] sm:$0xff]
    %v41 = vld [vmem:[%s3 + $0x18] sm:$0xff]
    %v42 = vld [vmem:[%s3 + $0x20] sm:$0xff]
    %v43 = vld [vmem:[%s3 + $0x28] sm:$0xff]
    %v44 = vld [vmem:[%s3 + $0x30] sm:$0xff]
    %v45 = vld [vmem:[%s3 + $0x38] sm:$0xff]
    %v46 = vld [vmem:[%s3 + $0x40] sm:$0xff]
    %v47 = vld [vmem:[%s3 + $0x48] sm:$0xff]
    %v48 = vld [vmem:[%s3 + $0x50] sm:$0xff]
    %v49 = vld [vmem:[%s3 + $0x58] sm:$0xff]
    %v50 = vld [vmem:[%s3 + $0x60] sm:$0xff]
    %v51 = vld [vmem:[%s3 + $0x68] sm:$0xff]
    %v52 = vld [vmem:[%s3 + $0x70] sm:$0xff]
    %v53 = vld [vmem:[%s3 + $0x78] sm:$0xff]
    %v54 = vld [vmem:[%s3 + $0x80] sm:$0xff]
    %v55 = vld [vmem:[%s3 + $0x88] sm:$0xff]
    %v56 = vld [vmem:[%s3 + $0x90] sm:$0xff]
    %v57 = vld [vmem:[%s3 + $0x98] sm:$0xff]
    %v58 = vld [vmem:[%s3 + $0xa0] sm:$0xff]
    %v59 = vld [vmem:[%s3 + $0xa8] sm:$0xff]
    %v60 = vld [vmem:[%s3 + $0xb0] sm:$0xff]
    %v61 = vld [vmem:[%s3 + $0xb8] sm:$0xff]
    %v62 = vld [vmem:[%s3 + $0xc0] sm:$0xff]
    %v63 = vld [vmem:[%s3 + $0xc8] sm:$0xff]
    %v64 = vld [vmem:[%s3 + $0xd0] sm:$0xff]
    %v65 = vld [vmem:[%s3 + $0xd8] sm:$0xff]
    %v66 = vld [vmem:[%s3 + $0xe0] sm:$0xff]
    %v67 = vld [vmem:[%s3 + $0xe8] sm:$0xff]
    %v68 = vld [vmem:[%s3 + $0xf0] sm:$0xff]
    %v69 = vld [vmem:[%s3 + $0xf8] sm:$0xff]
    %v70 = vld [vmem:[%s3 + $0x100] sm:$0xff]
    %v71 = vld [vmem:[%s3 + $0x108] sm:$0xff]
    %v72 = vld [vmem:[%s3 + $0x110] sm:$0xff]
    %v73 = vld [vmem:[%s3 + $0x118] sm:$0xff]
    %v74 = vld [vmem:[%s3 + $0x120] sm:$0xff]
    %v75 = vld [vmem:[%s3 + $0x128] sm:$0xff]
    %v76 = vld [vmem:[%s3 + $0x130] sm:$0xff]
    %v77 = vld [vmem:[%s3 + $0x138] sm:$0xff]
    %v78 = vld [vmem:[%s3 + $0x140] sm:$0xff]
    %v79 = vld [vmem:[%s3 + $0x148] sm:$0xff]
    %v80 = vld [vmem:[%s3 + $0x150] sm:$0xff]
    %v81 = vld [vmem:[%s3 + $0x158] sm:$0xff]
    %v82 = vld [vmem:[%s3 + $0x160] sm:$0xff]
    %v83 = vld [vmem:[%s3 + $0x168] sm:$0xff]
    %v84 = vld [vmem:[%s3 + $0x170] sm:$0xff]
    %v85 = vld [vmem:[%s3 + $0x178] sm:$0xff]
    %v86 = vld [vmem:[%s3 + $0x180] sm:$0xff]
    %v87 = vld [vmem:[%s3 + $0x188] sm:$0xff]
    %v88 = vld [vmem:[%s3 + $0x190] sm:$0xff]
    %v89 = vld [vmem:[%s3 + $0x198] sm:$0xff]
    %v90 = vld [vmem:[%s3 + $0x1a0] sm:$0xff]
    %v91 = vld [vmem:[%s3 + $0x1a8] sm:$0xff]
    %v92 = vld [vmem:[%s3 + $0x1b0] sm:$0xff]
    %v93 = vld [vmem:[%s3 + $0x1b8] sm:$0xff]
    %v94 = vld [vmem:[%s3 + $0x1c0] sm:$0xff]
    %v95 = vld [vmem:[%s3 + $0x1c8] sm:$0xff]
    %v96 = vld [vmem:[%s3 + $0x1d0] sm:$0xff]
    %v97 = vld [vmem:[%s3 + $0x1d8] sm:$0xff]
    %v98 = vld [vmem:[%s3 + $0x1e0] sm:$0xff]
    %v99 = vld [vmem:[%s3 + $0x1e8] sm:$0xff]
    %v100 = vld [vmem:[%s3 + $0x1f0] sm:$0xff]
    %v101 = vld [vmem:[%s3 + $0x1f8] sm:$0xff]
    %v102 = vld [vmem:[%s3 + $0x200] sm:$0xff]
    %v103 = vld [vmem:[%s3 + $0x208] sm:$0xff]
    %v104 = vld [vmem:[%s3 + $0x210] sm:$0xff]
    %v105 = vld [vmem:[%s3 + $0x218] sm:$0xff]
    %v106 = vld [vmem:[%s3 + $0x220] sm:$0xff]
    %v107 = vld [vmem:[%s3 + $0x228] sm:$0xff]
    %v108 = vld [vmem:[%s3 + $0x230] sm:$0xff]
    %v109 = vld [vmem:[%s3 + $0x238] sm:$0xff]
    %v110 = vld [vmem:[%s3 + $0x240] sm:$0xff]
    %v111 = vld [vmem:[%s3 + $0x248] sm:$0xff]
    %v112 = vld [vmem:[%s3 + $0x250] sm:$0xff]
    %v113 = vld [vmem:[%s3 + $0x258] sm:$0xff]
    %v114 = vld [vmem:[%s3 + $0x260] sm:$0xff]
    %v115 = vld [vmem:[%s3 + $0x268] sm:$0xff]
    %v116 = vld [vmem:[%s3 + $0x270] sm:$0xff]
    %v117 = vld [vmem:[%s3 + $0x278] sm:$0xff]
    %v118 = vld [vmem:[%s3 + $0x280] sm:$0xff]
    %v119 = vld [vmem:[%s3 + $0x288] sm:$0xff]
    %v120 = vld [vmem:[%s3 + $0x290] sm:$0xff]
    %v121 = vld [vmem:[%s3 + $0x298] sm:$0xff]
    %v122 = vld [vmem:[%s3 + $0x2a0] sm:$0xff]
    %v123 = vld [vmem:[%s3 + $0x2a8] sm:$0xff]
    %v124 = vld [vmem:[%s3 + $0x2b0] sm:$0xff]
    %v125 = vld [vmem:[%s3 + $0x2b8] sm:$0xff]
    %v126 = vld [vmem:[%s3 + $0x2c0] sm:$0xff]
    %v127 = vld [vmem:[%s3 + $0x2c8] sm:$0xff]
    %v128 = vld [vmem:[%s3 + $0x2d0] sm:$0xff]
    %v129 = vld [vmem:[%s3 + $0x2d8] sm:$0xff]
    %v130 = vld [vmem:[%s3 + $0x2e0] sm:$0xff]
    %v131 = vld [vmem:[%s3 + $0x2e8] sm:$0xff]
    %v132 = vld [vmem:[%s3 + $0x2f0] sm:$0xff]
    %v133 = vld [vmem:[%s3 + $0x2f8] sm:$0xff]
    %v134 = vld [vmem:[%s3 + $0x300] sm:$0xff]
    %v135 = vld [vmem:[%s3 + $0x308] sm:$0xff]
    %v136 = vld [vmem:[%s3 + $0x310] sm:$0xff]
    %v137 = vld [vmem:[%s3 + $0x318] sm:$0xff]
    %v138 = vld [vmem:[%s3 + $0x320] sm:$0xff]
    %v139 = vld [vmem:[%s3 + $0x328] sm:$0xff]
    %v140 = vld [vmem:[%s3 + $0x330] sm:$0xff]
    %v141 = vld [vmem:[%s3 + $0x338] sm:$0xff]
    %v142 = vld [vmem:[%s3 + $0x340] sm:$0xff]
    %v143 = vld [vmem:[%s3 + $0x348] sm:$0xff]
    %v144 = vld [vmem:[%s3 + $0x350] sm:$0xff]
    %v145 = vld [vmem:[%s3 + $0x358] sm:$0xff]
    %v146 = vld [vmem:[%s3 + $0x360] sm:$0xff]
    %v147 = vld [vmem:[%s3 + $0x368] sm:$0xff]
    %v148 = vld [vmem:[%s3 + $0x370] sm:$0xff]
    %v149 = vld [vmem:[%s3 + $0x378] sm:$0xff]
    %v150 = vld [vmem:[%s3 + $0x380] sm:$0xff]
    %v151 = vld [vmem:[%s3 + $0x388] sm:$0xff]
    %v152 = vld [vmem:[%s3 + $0x390] sm:$0xff]
    %v153 = vld [vmem:[%s3 + $0x398] sm:$0xff]
    %v154 = vld [vmem:[%s3 + $0x3a0] sm:$0xff]
    %v155 = vld [vmem:[%s3 + $0x3a8] sm:$0xff]
    %v156 = vld [vmem:[%s3 + $0x3b0] sm:$0xff]
    %v157 = vld [vmem:[%s3 + $0x3b8] sm:$0xff]
    %v158 = vld [vmem:[%s3 + $0x3c0] sm:$0xff]
    %v159 = vld [vmem:[%s3 + $0x3c8] sm:$0xff]
    %v160 = vld [vmem:[%s3 + $0x3d0] sm:$0xff]
    %v161 = vld [vmem:[%s3 + $0x3d8] sm:$0xff]
    %v162 = vld [vmem:[%s3 + $0x3e0] sm:$0xff]
    %v163 = vld [vmem:[%s3 + $0x3e8] sm:$0xff]
    %v164 = vld [vmem:[%s3 + $0x3f0] sm:$0xff]
    %v165 = vld [vmem:[%s3 + $0x3f8] sm:$0xff]
    %v166 = vld [vmem:[%s3 + $0x400] sm:$0xff]
    %v167 = vld [vmem:[%s3 + $0x408] sm:$0xff]
    %v168 = vld [vmem:[%s3 + $0x410] sm:$0xff]
    %v169 = vld [vmem:[%s3 + $0x418] sm:$0xff]
    %v170 = vld [vmem:[%s3 + $0x420] sm:$0xff]
    %v171 = vld [vmem:[%s3 + $0x428] sm:$0xff]
    %v172 = vld [vmem:[%s3 + $0x430] sm:$0xff]
    %v173 = vld [vmem:[%s3 + $0x438] sm:$0xff]
    %v174 = vld [vmem:[%s3 + $0x440] sm:$0xff]
    %v175 = vld [vmem:[%s3 + $0x448] sm:$0xff]
    %v176 = vld [vmem:[%s3 + $0x450] sm:$0xff]
    %v177 = vld [vmem:[%s3 + $0x458] sm:$0xff]
    %v178 = vld [vmem:[%s3 + $0x460] sm:$0xff]
    %v179 = vld [vmem:[%s3 + $0x468] sm:$0xff]
    %v180 = vld [vmem:[%s3 + $0x470] sm:$0xff]
    %v181 = vld [vmem:[%s3 + $0x478] sm:$0xff]
    %v182 = vld [vmem:[%s4] sm:$0x7]
    %v183 = vld [vmem:[%s5] sm:$0x7]
    %v184 = vld [vmem:[%s7] sm:$0x7]
    %vm185 = vcmask 130048
    %v186 = vsel %vm185, %v30, 0.0
    %187 = vadd.xlane.f32.xlu0 %v186
    %v188 = vpop.xlane.xlu0 %187
    %v189 = vsel %vm185, %v31, 0.0
    %190 = vadd.xlane.f32.xlu0 %v189
    %v191 = vpop.xlane.xlu0 %190
    %v192 = vsel %vm185, %v32, 0.0
    %193 = vadd.xlane.f32.xlu0 %v192
    %v194 = vpop.xlane.xlu0 %193
    %v195 = vsel %vm185, %v33, 0.0
    %196 = vadd.xlane.f32.xlu0 %v195
    %v197 = vpop.xlane.xlu0 %196
    %v198 = vsel %vm185, %v34, 0.0
    %199 = vadd.xlane.f32.xlu0 %v198
    %v200 = vpop.xlane.xlu0 %199
    %v201 = vsel %vm185, %v35, 0.0
    %202 = vadd.xlane.f32.xlu0 %v201
    %v203 = vpop.xlane.xlu0 %202
    %v204 = vsel %vm185, %v36, 0.0
    %205 = vadd.xlane.f32.xlu0 %v204
    %v206 = vpop.xlane.xlu0 %205
    %v207 = vsel %vm185, %v37, 0.0
    %208 = vadd.xlane.f32.xlu0 %v207
    %v209 = vpop.xlane.xlu0 %208
    %v211 = vlaneseq
    %v212 = vshrl.u32 %v211, 7
    %v213 = vsub.s32 0, %v212
    %v214 = vrot.slane %v182, %v213
    %v215 = vlaneseq
    %v216 = vshrl.u32 %v215, 7
    %v217 = vsub.s32 1, %v216
    %v218 = vrot.slane %v182, %v217
    %v219 = vlaneseq
    %v220 = vshrl.u32 %v219, 7
    %v221 = vsub.s32 2, %v220
    %v222 = vrot.slane %v182, %v221
    %v226 = vmul.f32 %v188, %v214
    %v227 = vmul.f32 %v188, %v218
    %v228 = vmul.f32 %v188, %v222
    %v229 = vmul.f32 %v191, %v214
    %v230 = vmul.f32 %v191, %v218
    %v231 = vmul.f32 %v191, %v222
    %v232 = vmul.f32 %v194, %v214
    %v233 = vmul.f32 %v194, %v218
    %v234 = vmul.f32 %v194, %v222
    %v235 = vmul.f32 %v197, %v214
    %v236 = vmul.f32 %v197, %v218
    %v237 = vmul.f32 %v197, %v222
    %v239 = vlaneseq
    %v240 = vshrl.u32 %v239, 7
    %v241 = vsub.s32 0, %v240
    %v242 = vrot.slane %v183, %v241
    %v243 = vlaneseq
    %v244 = vshrl.u32 %v243, 7
    %v245 = vsub.s32 1, %v244
    %v246 = vrot.slane %v183, %v245
    %v247 = vlaneseq
    %v248 = vshrl.u32 %v247, 7
    %v249 = vsub.s32 2, %v248
    %v250 = vrot.slane %v183, %v249
    %v254 = vmul.f32 %v200, %v242
    %v255 = vmul.f32 %v200, %v246
    %v256 = vmul.f32 %v200, %v250
    %v257 = vmul.f32 %v203, %v242
    %v258 = vmul.f32 %v203, %v246
    %v259 = vmul.f32 %v203, %v250
    %v260 = vmul.f32 %v206, %v242
    %v261 = vmul.f32 %v206, %v246
    %v262 = vmul.f32 %v206, %v250
    %v263 = vmul.f32 %v209, %v242
    %v264 = vmul.f32 %v209, %v246
    %v265 = vmul.f32 %v209, %v250
    %v266 = vadd.f32 %v226, %v254
    %v267 = vadd.f32 %v227, %v255
    %v268 = vadd.f32 %v228, %v256
    %v269 = vadd.f32 %v229, %v257
    %v270 = vadd.f32 %v230, %v258
    %v271 = vadd.f32 %v231, %v259
    %v272 = vadd.f32 %v232, %v260
    %v273 = vadd.f32 %v233, %v261
    %v274 = vadd.f32 %v234, %v262
    %v275 = vadd.f32 %v235, %v263
    %v276 = vadd.f32 %v236, %v264
    %v277 = vadd.f32 %v237, %v265
    %v279 = vlaneseq
    %v280 = vshrl.u32 %v279, 7
    %v281 = vsub.s32 0, %v280
    %v282 = vrot.slane %v184, %v281
    %v283 = vlaneseq
    %v284 = vshrl.u32 %v283, 7
    %v285 = vsub.s32 1, %v284
    %v286 = vrot.slane %v184, %v285
    %v287 = vlaneseq
    %v288 = vshrl.u32 %v287, 7
    %v289 = vsub.s32 2, %v288
    %v290 = vrot.slane %v184, %v289
    %v294 = vadd.f32 %v266, %v282
    %v295 = vadd.f32 %v267, %v286
    %v296 = vadd.f32 %v268, %v290
    %v297 = vadd.f32 %v269, %v282
    %v298 = vadd.f32 %v270, %v286
    %v299 = vadd.f32 %v271, %v290
    %v300 = vadd.f32 %v272, %v282
    %v301 = vadd.f32 %v273, %v286
    %v302 = vadd.f32 %v274, %v290
    %v303 = vadd.f32 %v275, %v282
    %v304 = vadd.f32 %v276, %v286
    %v305 = vadd.f32 %v277, %v290
    %v306 = vld [vmem:[%s6] sm:$0x7]
    %v308 = vlaneseq
    %v309 = vshrl.u32 %v308, 7
    %v310 = vsub.s32 0, %v309
    %v311 = vrot.slane %v306, %v310
    %v312 = vlaneseq
    %v313 = vshrl.u32 %v312, 7
    %v314 = vsub.s32 1, %v313
    %v315 = vrot.slane %v306, %v314
    %v316 = vlaneseq
    %v317 = vshrl.u32 %v316, 7
    %v318 = vsub.s32 2, %v317
    %v319 = vrot.slane %v306, %v318
    %v323 = vld [vmem:[%s2] sm:$0xff]
    %v324 = vld [vmem:[%s2 + $0x8] sm:$0xff]
    %v325 = vld [vmem:[%s2 + $0x10] sm:$0xff]
    %v326 = vld [vmem:[%s2 + $0x18] sm:$0xff]
    %327 = vmatprep.subr.mxu0 %v174
    %328 = vmatpush1.msra.mxu0 %v173
    %329 = vmatprep.subr.mxu0 %v165
    %330 = vmatpush1.msra.mxu0 %v164
    %331 = vmatprep.subr.mxu0 %v156
    %332 = vmatpush1.msra.mxu0 %v155
    %333 = vmatprep.subr.mxu0 %v147
    %334 = vmatpush1.msra.mxu0 %v146
    %335 = vmatprep.subr.mxu0 %v138
    %336 = vmatpush1.msra.mxu0 %v137
    %337 = vmatprep.subr.mxu0 %v129
    %338 = vmatpush1.msra.mxu0 %v128
    %339 = vmatprep.subr.mxu0 %v120
    %340 = vmatpush1.msra.mxu0 %v119
    %341 = vmatprep.subr.mxu0 %v111
    %342 = vmatpush1.msra.mxu0 %v110
    %343 = vmatprep.subr.mxu0 %v102
    %344 = vmatpush1.msra.mxu0 %v101
    %345 = vmatprep.subr.mxu0 %v93
    %346 = vmatpush1.msra.mxu0 %v92
    %347 = vmatprep.subr.mxu0 %v84
    %348 = vmatpush1.msra.mxu0 %v83
    %349 = vmatprep.subr.mxu0 %v75
    %350 = vmatpush1.msra.mxu0 %v74
    %351 = vmatprep.subr.mxu0 %v66
    %352 = vmatpush1.msra.mxu0 %v65
    %353 = vmatprep.subr.mxu0 %v57
    %354 = vmatpush1.msra.mxu0 %v56
    %355 = vmatprep.subr.mxu0 %v48
    %356 = vmatpush1.msra.mxu0 %v47
    %357 = vmatprep.subr.mxu0 %v39
    %358 = vmatpush1.msra.mxu0 %v38
    %359 = vmatprep.subr.mxu0 0.0
    %360 = vmatpush2.msra.mxu0 0.0
    %361 = vmatprep.subr.mxu0 0.0
    %362 = vmatpush2.msra.mxu0 0.0
    %363 = vmatprep.subr.mxu0 0.0
    %364 = vmatpush2.msra.mxu0 0.0
    %365 = vmatprep.subr.mxu0 0.0
    %366 = vmatpush2.msra.mxu0 0.0
    %367 = vmatprep.subr.mxu0 0.0
    %368 = vmatpush2.msra.mxu0 0.0
    %369 = vmatprep.subr.mxu0 0.0
    %370 = vmatpush2.msra.mxu0 0.0
    %371 = vmatprep.subr.mxu0 0.0
    %372 = vmatpush2.msra.mxu0 0.0
    %373 = vmatprep.subr.mxu0 0.0
    %374 = vmatpush2.msra.mxu0 0.0
    %375 = vmatprep.subr.mxu0 0.0
    %376 = vmatpush2.msra.mxu0 0.0
    %377 = vmatprep.subr.mxu0 0.0
    %378 = vmatpush2.msra.mxu0 0.0
    %379 = vmatprep.subr.mxu0 0.0
    %380 = vmatpush2.msra.mxu0 0.0
    %381 = vmatprep.subr.mxu0 0.0
    %382 = vmatpush2.msra.mxu0 0.0
    %383 = vmatprep.subr.mxu0 0.0
    %384 = vmatpush2.msra.mxu0 0.0
    %385 = vmatprep.subr.mxu0 0.0
    %386 = vmatpush2.msra.mxu0 0.0
    %387 = vmatprep.subr.mxu0 0.0
    %388 = vmatpush2.msra.mxu0 0.0
    %389 = vmatprep.subr.mxu0 0.0
    %390 = vmatpush2.msra.mxu0 0.0
    %391 = vmatprep.mubr.f32.mxu0 0.0
    %392 = vmatmul.mubr.f32.gmra.mxu0 %v323
    %v393 = vpop.f32.mrf.mxu0
    %v394 = vadd.f32 0.0, %v393
    %v395 = vpop.f32.mrf.mxu0
    %v396 = vadd.f32 0.0, %v395
    %397 = vmatprep.mubr.f32.mxu0 0.0
    %398 = vmatmul.mubr.f32.gmra.mxu0 %v324
    %v399 = vpop.f32.mrf.mxu0
    %v400 = vadd.f32 0.0, %v399
    %v401 = vpop.f32.mrf.mxu0
    %v402 = vadd.f32 0.0, %v401
    %403 = vmatprep.mubr.f32.mxu0 0.0
    %404 = vmatmul.mubr.f32.gmra.mxu0 %v325
    %v405 = vpop.f32.mrf.mxu0
    %v406 = vadd.f32 0.0, %v405
    %v407 = vpop.f32.mrf.mxu0
    %v408 = vadd.f32 0.0, %v407
    %409 = vmatprep.mubr.f32.mxu0 0.0
    %410 = vmatmul.mubr.f32.gmra.mxu0 %v326
    %v411 = vpop.f32.mrf.mxu0
    %v412 = vadd.f32 0.0, %v411
    %v413 = vpop.f32.mrf.mxu0
    %v414 = vadd.f32 0.0, %v413
    %415 = vdwg.mxu0
    %416 = vmatprep.subr.mxu0 %v176
    %417 = vmatpush1.msra.mxu0 %v175
    %418 = vmatprep.subr.mxu0 %v167
    %419 = vmatpush1.msra.mxu0 %v166
    %420 = vmatprep.subr.mxu0 %v158
    %421 = vmatpush1.msra.mxu0 %v157
    %422 = vmatprep.subr.mxu0 %v149
    %423 = vmatpush1.msra.mxu0 %v148
    %424 = vmatprep.subr.mxu0 %v140
    %425 = vmatpush1.msra.mxu0 %v139
    %426 = vmatprep.subr.mxu0 %v131
    %427 = vmatpush1.msra.mxu0 %v130
    %428 = vmatprep.subr.mxu0 %v122
    %429 = vmatpush1.msra.mxu0 %v121
    %430 = vmatprep.subr.mxu0 %v113
    %431 = vmatpush1.msra.mxu0 %v112
    %432 = vmatprep.subr.mxu0 %v104
    %433 = vmatpush1.msra.mxu0 %v103
    %434 = vmatprep.subr.mxu0 %v95
    %435 = vmatpush1.msra.mxu0 %v94
    %436 = vmatprep.subr.mxu0 %v86
    %437 = vmatpush1.msra.mxu0 %v85
    %438 = vmatprep.subr.mxu0 %v77
    %439 = vmatpush1.msra.mxu0 %v76
    %440 = vmatprep.subr.mxu0 %v68
    %441 = vmatpush1.msra.mxu0 %v67
    %442 = vmatprep.subr.mxu0 %v59
    %443 = vmatpush1.msra.mxu0 %v58
    %444 = vmatprep.subr.mxu0 %v50
    %445 = vmatpush1.msra.mxu0 %v49
    %446 = vmatprep.subr.mxu0 %v41
    %447 = vmatpush1.msra.mxu0 %v40
    %448 = vmatprep.subr.mxu0 0.0
    %449 = vmatpush2.msra.mxu0 0.0
    %450 = vmatprep.subr.mxu0 0.0
    %451 = vmatpush2.msra.mxu0 0.0
    %452 = vmatprep.subr.mxu0 0.0
    %453 = vmatpush2.msra.mxu0 0.0
    %454 = vmatprep.subr.mxu0 0.0
    %455 = vmatpush2.msra.mxu0 0.0
    %456 = vmatprep.subr.mxu0 0.0
    %457 = vmatpush2.msra.mxu0 0.0
    %458 = vmatprep.subr.mxu0 0.0
    %459 = vmatpush2.msra.mxu0 0.0
    %460 = vmatprep.subr.mxu0 0.0
    %461 = vmatpush2.msra.mxu0 0.0
    %462 = vmatprep.subr.mxu0 0.0
    %463 = vmatpush2.msra.mxu0 0.0
    %464 = vmatprep.subr.mxu0 0.0
    %465 = vmatpush2.msra.mxu0 0.0
    %466 = vmatprep.subr.mxu0 0.0
    %467 = vmatpush2.msra.mxu0 0.0
    %468 = vmatprep.subr.mxu0 0.0
    %469 = vmatpush2.msra.mxu0 0.0
    %470 = vmatprep.subr.mxu0 0.0
    %471 = vmatpush2.msra.mxu0 0.0
    %472 = vmatprep.subr.mxu0 0.0
    %473 = vmatpush2.msra.mxu0 0.0
    %474 = vmatprep.subr.mxu0 0.0
    %475 = vmatpush2.msra.mxu0 0.0
    %476 = vmatprep.subr.mxu0 0.0
    %477 = vmatpush2.msra.mxu0 0.0
    %478 = vmatprep.subr.mxu0 0.0
    %479 = vmatpush2.msra.mxu0 0.0
    %480 = vmatprep.mubr.f32.mxu0 0.0
    %481 = vmatmul.mubr.f32.gmra.mxu0 %v323
    %v482 = vpop.f32.mrf.mxu0
    %v483 = vadd.f32 0.0, %v482
    %v484 = vpop.f32.mrf.mxu0
    %v485 = vadd.f32 0.0, %v484
    %486 = vmatprep.mubr.f32.mxu0 0.0
    %487 = vmatmul.mubr.f32.gmra.mxu0 %v324
    %v488 = vpop.f32.mrf.mxu0
    %v489 = vadd.f32 0.0, %v488
    %v490 = vpop.f32.mrf.mxu0
    %v491 = vadd.f32 0.0, %v490
    %492 = vmatprep.mubr.f32.mxu0 0.0
    %493 = vmatmul.mubr.f32.gmra.mxu0 %v325
    %v494 = vpop.f32.mrf.mxu0
    %v495 = vadd.f32 0.0, %v494
    %v496 = vpop.f32.mrf.mxu0
    %v497 = vadd.f32 0.0, %v496
    %498 = vmatprep.mubr.f32.mxu0 0.0
    %499 = vmatmul.mubr.f32.gmra.mxu0 %v326
    %v500 = vpop.f32.mrf.mxu0
    %v501 = vadd.f32 0.0, %v500
    %v502 = vpop.f32.mrf.mxu0
    %v503 = vadd.f32 0.0, %v502
    %504 = vdwg.mxu0
    %505 = vmatprep.subr.mxu0 %v178
    %506 = vmatpush1.msra.mxu0 %v177
    %507 = vmatprep.subr.mxu0 %v169
    %508 = vmatpush1.msra.mxu0 %v168
    %509 = vmatprep.subr.mxu0 %v160
    %510 = vmatpush1.msra.mxu0 %v159
    %511 = vmatprep.subr.mxu0 %v151
    %512 = vmatpush1.msra.mxu0 %v150
    %513 = vmatprep.subr.mxu0 %v142
    %514 = vmatpush1.msra.mxu0 %v141
    %515 = vmatprep.subr.mxu0 %v133
    %516 = vmatpush1.msra.mxu0 %v132
    %517 = vmatprep.subr.mxu0 %v124
    %518 = vmatpush1.msra.mxu0 %v123
    %519 = vmatprep.subr.mxu0 %v115
    %520 = vmatpush1.msra.mxu0 %v114
    %521 = vmatprep.subr.mxu0 %v106
    %522 = vmatpush1.msra.mxu0 %v105
    %523 = vmatprep.subr.mxu0 %v97
    %524 = vmatpush1.msra.mxu0 %v96
    %525 = vmatprep.subr.mxu0 %v88
    %526 = vmatpush1.msra.mxu0 %v87
    %527 = vmatprep.subr.mxu0 %v79
    %528 = vmatpush1.msra.mxu0 %v78
    %529 = vmatprep.subr.mxu0 %v70
    %530 = vmatpush1.msra.mxu0 %v69
    %531 = vmatprep.subr.mxu0 %v61
    %532 = vmatpush1.msra.mxu0 %v60
    %533 = vmatprep.subr.mxu0 %v52
    %534 = vmatpush1.msra.mxu0 %v51
    %535 = vmatprep.subr.mxu0 %v43
    %536 = vmatpush1.msra.mxu0 %v42
    %537 = vmatprep.subr.mxu0 0.0
    %538 = vmatpush2.msra.mxu0 0.0
    %539 = vmatprep.subr.mxu0 0.0
    %540 = vmatpush2.msra.mxu0 0.0
    %541 = vmatprep.subr.mxu0 0.0
    %542 = vmatpush2.msra.mxu0 0.0
    %543 = vmatprep.subr.mxu0 0.0
    %544 = vmatpush2.msra.mxu0 0.0
    %545 = vmatprep.subr.mxu0 0.0
    %546 = vmatpush2.msra.mxu0 0.0
    %547 = vmatprep.subr.mxu0 0.0
    %548 = vmatpush2.msra.mxu0 0.0
    %549 = vmatprep.subr.mxu0 0.0
    %550 = vmatpush2.msra.mxu0 0.0
    %551 = vmatprep.subr.mxu0 0.0
    %552 = vmatpush2.msra.mxu0 0.0
    %553 = vmatprep.subr.mxu0 0.0
    %554 = vmatpush2.msra.mxu0 0.0
    %555 = vmatprep.subr.mxu0 0.0
    %556 = vmatpush2.msra.mxu0 0.0
    %557 = vmatprep.subr.mxu0 0.0
    %558 = vmatpush2.msra.mxu0 0.0
    %559 = vmatprep.subr.mxu0 0.0
    %560 = vmatpush2.msra.mxu0 0.0
    %561 = vmatprep.subr.mxu0 0.0
    %562 = vmatpush2.msra.mxu0 0.0
    %563 = vmatprep.subr.mxu0 0.0
    %564 = vmatpush2.msra.mxu0 0.0
    %565 = vmatprep.subr.mxu0 0.0
    %566 = vmatpush2.msra.mxu0 0.0
    %567 = vmatprep.subr.mxu0 0.0
    %568 = vmatpush2.msra.mxu0 0.0
    %569 = vmatprep.mubr.f32.mxu0 0.0
    %570 = vmatmul.mubr.f32.gmra.mxu0 %v323
    %v571 = vpop.f32.mrf.mxu0
    %v572 = vadd.f32 0.0, %v571
    %v573 = vpop.f32.mrf.mxu0
    %v574 = vadd.f32 0.0, %v573
    %575 = vmatprep.mubr.f32.mxu0 0.0
    %576 = vmatmul.mubr.f32.gmra.mxu0 %v324
    %v577 = vpop.f32.mrf.mxu0
    %v578 = vadd.f32 0.0, %v577
    %v579 = vpop.f32.mrf.mxu0
    %v580 = vadd.f32 0.0, %v579
    %581 = vmatprep.mubr.f32.mxu0 0.0
    %582 = vmatmul.mubr.f32.gmra.mxu0 %v325
    %v583 = vpop.f32.mrf.mxu0
    %v584 = vadd.f32 0.0, %v583
    %v585 = vpop.f32.mrf.mxu0
    %v586 = vadd.f32 0.0, %v585
    %587 = vmatprep.mubr.f32.mxu0 0.0
    %588 = vmatmul.mubr.f32.gmra.mxu0 %v326
    %v589 = vpop.f32.mrf.mxu0
    %v590 = vadd.f32 0.0, %v589
    %v591 = vpop.f32.mrf.mxu0
    %v592 = vadd.f32 0.0, %v591
    %593 = vdwg.mxu0
    %594 = vmatprep.subr.mxu0 %v180
    %595 = vmatpush1.msra.mxu0 %v179
    %596 = vmatprep.subr.mxu0 %v171
    %597 = vmatpush1.msra.mxu0 %v170
    %598 = vmatprep.subr.mxu0 %v162
    %599 = vmatpush1.msra.mxu0 %v161
    %600 = vmatprep.subr.mxu0 %v153
    %601 = vmatpush1.msra.mxu0 %v152
    %602 = vmatprep.subr.mxu0 %v144
    %603 = vmatpush1.msra.mxu0 %v143
    %604 = vmatprep.subr.mxu0 %v135
    %605 = vmatpush1.msra.mxu0 %v134
    %606 = vmatprep.subr.mxu0 %v126
    %607 = vmatpush1.msra.mxu0 %v125
    %608 = vmatprep.subr.mxu0 %v117
    %609 = vmatpush1.msra.mxu0 %v116
    %610 = vmatprep.subr.mxu0 %v108
    %611 = vmatpush1.msra.mxu0 %v107
    %612 = vmatprep.subr.mxu0 %v99
    %613 = vmatpush1.msra.mxu0 %v98
    %614 = vmatprep.subr.mxu0 %v90
    %615 = vmatpush1.msra.mxu0 %v89
    %616 = vmatprep.subr.mxu0 %v81
    %617 = vmatpush1.msra.mxu0 %v80
    %618 = vmatprep.subr.mxu0 %v72
    %619 = vmatpush1.msra.mxu0 %v71
    %620 = vmatprep.subr.mxu0 %v63
    %621 = vmatpush1.msra.mxu0 %v62
    %622 = vmatprep.subr.mxu0 %v54
    %623 = vmatpush1.msra.mxu0 %v53
    %624 = vmatprep.subr.mxu0 %v45
    %625 = vmatpush1.msra.mxu0 %v44
    %626 = vmatprep.subr.mxu0 0.0
    %627 = vmatpush2.msra.mxu0 0.0
    %628 = vmatprep.subr.mxu0 0.0
    %629 = vmatpush2.msra.mxu0 0.0
    %630 = vmatprep.subr.mxu0 0.0
    %631 = vmatpush2.msra.mxu0 0.0
    %632 = vmatprep.subr.mxu0 0.0
    %633 = vmatpush2.msra.mxu0 0.0
    %634 = vmatprep.subr.mxu0 0.0
    %635 = vmatpush2.msra.mxu0 0.0
    %636 = vmatprep.subr.mxu0 0.0
    %637 = vmatpush2.msra.mxu0 0.0
    %638 = vmatprep.subr.mxu0 0.0
    %639 = vmatpush2.msra.mxu0 0.0
    %640 = vmatprep.subr.mxu0 0.0
    %641 = vmatpush2.msra.mxu0 0.0
    %642 = vmatprep.subr.mxu0 0.0
    %643 = vmatpush2.msra.mxu0 0.0
    %644 = vmatprep.subr.mxu0 0.0
    %645 = vmatpush2.msra.mxu0 0.0
    %646 = vmatprep.subr.mxu0 0.0
    %647 = vmatpush2.msra.mxu0 0.0
    %648 = vmatprep.subr.mxu0 0.0
    %649 = vmatpush2.msra.mxu0 0.0
    %650 = vmatprep.subr.mxu0 0.0
    %651 = vmatpush2.msra.mxu0 0.0
    %652 = vmatprep.subr.mxu0 0.0
    %653 = vmatpush2.msra.mxu0 0.0
    %654 = vmatprep.subr.mxu0 0.0
    %655 = vmatpush2.msra.mxu0 0.0
    %656 = vmatprep.subr.mxu0 0.0
    %657 = vmatpush2.msra.mxu0 0.0
    %658 = vmatprep.mubr.f32.mxu0 0.0
    %659 = vmatmul.mubr.f32.gmra.mxu0 %v323
    %v660 = vpop.f32.mrf.mxu0
    %v661 = vadd.f32 0.0, %v660
    %v662 = vpop.f32.mrf.mxu0
    %v663 = vadd.f32 0.0, %v662
    %664 = vmatprep.mubr.f32.mxu0 0.0
    %665 = vmatmul.mubr.f32.gmra.mxu0 %v324
    %v666 = vpop.f32.mrf.mxu0
    %v667 = vadd.f32 0.0, %v666
    %v668 = vpop.f32.mrf.mxu0
    %v669 = vadd.f32 0.0, %v668
    %670 = vmatprep.mubr.f32.mxu0 0.0
    %671 = vmatmul.mubr.f32.gmra.mxu0 %v325
    %v672 = vpop.f32.mrf.mxu0
    %v673 = vadd.f32 0.0, %v672
    %v674 = vpop.f32.mrf.mxu0
    %v675 = vadd.f32 0.0, %v674
    %676 = vmatprep.mubr.f32.mxu0 0.0
    %677 = vmatmul.mubr.f32.gmra.mxu0 %v326
    %v678 = vpop.f32.mrf.mxu0
    %v679 = vadd.f32 0.0, %v678
    %v680 = vpop.f32.mrf.mxu0
    %v681 = vadd.f32 0.0, %v680
    %682 = vdwg.mxu0
    %683 = vmatprep.subr.mxu0 0.0
    %684 = vmatpush1.msra.mxu0 %v181
    %685 = vmatprep.subr.mxu0 0.0
    %686 = vmatpush1.msra.mxu0 %v172
    %687 = vmatprep.subr.mxu0 0.0
    %688 = vmatpush1.msra.mxu0 %v163
    %689 = vmatprep.subr.mxu0 0.0
    %690 = vmatpush1.msra.mxu0 %v154
    %691 = vmatprep.subr.mxu0 0.0
    %692 = vmatpush1.msra.mxu0 %v145
    %693 = vmatprep.subr.mxu0 0.0
    %694 = vmatpush1.msra.mxu0 %v136
    %695 = vmatprep.subr.mxu0 0.0
    %696 = vmatpush1.msra.mxu0 %v127
    %697 = vmatprep.subr.mxu0 0.0
    %698 = vmatpush1.msra.mxu0 %v118
    %699 = vmatprep.subr.mxu0 0.0
    %700 = vmatpush1.msra.mxu0 %v109
    %701 = vmatprep.subr.mxu0 0.0
    %702 = vmatpush1.msra.mxu0 %v100
    %703 = vmatprep.subr.mxu0 0.0
    %704 = vmatpush1.msra.mxu0 %v91
    %705 = vmatprep.subr.mxu0 0.0
    %706 = vmatpush1.msra.mxu0 %v82
    %707 = vmatprep.subr.mxu0 0.0
    %708 = vmatpush1.msra.mxu0 %v73
    %709 = vmatprep.subr.mxu0 0.0
    %710 = vmatpush1.msra.mxu0 %v64
    %711 = vmatprep.subr.mxu0 0.0
    %712 = vmatpush1.msra.mxu0 %v55
    %713 = vmatprep.subr.mxu0 0.0
    %714 = vmatpush1.msra.mxu0 %v46
    %715 = vmatprep.subr.mxu0 0.0
    %716 = vmatpush2.msra.mxu0 0.0
    %717 = vmatprep.subr.mxu0 0.0
    %718 = vmatpush2.msra.mxu0 0.0
    %719 = vmatprep.subr.mxu0 0.0
    %720 = vmatpush2.msra.mxu0 0.0
    %721 = vmatprep.subr.mxu0 0.0
    %722 = vmatpush2.msra.mxu0 0.0
    %723 = vmatprep.subr.mxu0 0.0
    %724 = vmatpush2.msra.mxu0 0.0
    %725 = vmatprep.subr.mxu0 0.0
    %726 = vmatpush2.msra.mxu0 0.0
    %727 = vmatprep.subr.mxu0 0.0
    %728 = vmatpush2.msra.mxu0 0.0
    %729 = vmatprep.subr.mxu0 0.0
    %730 = vmatpush2.msra.mxu0 0.0
    %731 = vmatprep.subr.mxu0 0.0
    %732 = vmatpush2.msra.mxu0 0.0
    %733 = vmatprep.subr.mxu0 0.0
    %734 = vmatpush2.msra.mxu0 0.0
    %735 = vmatprep.subr.mxu0 0.0
    %736 = vmatpush2.msra.mxu0 0.0
    %737 = vmatprep.subr.mxu0 0.0
    %738 = vmatpush2.msra.mxu0 0.0
    %739 = vmatprep.subr.mxu0 0.0
    %740 = vmatpush2.msra.mxu0 0.0
    %741 = vmatprep.subr.mxu0 0.0
    %742 = vmatpush2.msra.mxu0 0.0
    %743 = vmatprep.subr.mxu0 0.0
    %744 = vmatpush2.msra.mxu0 0.0
    %745 = vmatprep.subr.mxu0 0.0
    %746 = vmatpush2.msra.mxu0 0.0
    %747 = vmatprep.mubr.f32.mxu0 0.0
    %748 = vmatmul.mubr.f32.gmra.mxu0 %v323
    %v749 = vpop.f32.mrf.mxu0
    %v750 = vadd.f32 0.0, %v749
    %v751 = vpop.f32.mrf.mxu0
    %752 = vmatprep.mubr.f32.mxu0 0.0
    %753 = vmatmul.mubr.f32.gmra.mxu0 %v324
    %v754 = vpop.f32.mrf.mxu0
    %v755 = vadd.f32 0.0, %v754
    %v756 = vpop.f32.mrf.mxu0
    %757 = vmatprep.mubr.f32.mxu0 0.0
    %758 = vmatmul.mubr.f32.gmra.mxu0 %v325
    %v759 = vpop.f32.mrf.mxu0
    %v760 = vadd.f32 0.0, %v759
    %v761 = vpop.f32.mrf.mxu0
    %762 = vmatprep.mubr.f32.mxu0 0.0
    %763 = vmatmul.mubr.f32.gmra.mxu0 %v326
    %v764 = vpop.f32.mrf.mxu0
    %v765 = vadd.f32 0.0, %v764
    %v766 = vpop.f32.mrf.mxu0
    %767 = vdwg.mxu0
    %v768 = vadd.f32 %v661, %v311
    %v769 = vadd.f32 %v663, %v315
    %v770 = vadd.f32 %v750, %v319
    %v771 = vadd.f32 %v667, %v311
    %v772 = vadd.f32 %v669, %v315
    %v773 = vadd.f32 %v755, %v319
    %v774 = vadd.f32 %v673, %v311
    %v775 = vadd.f32 %v675, %v315
    %v776 = vadd.f32 %v760, %v319
    %v777 = vadd.f32 %v679, %v311
    %v778 = vadd.f32 %v681, %v315
    %v779 = vadd.f32 %v765, %v319
    %v781 = vsel %vm185, %v34, 0
    %v784 = vsel %vm185, %v35, 0
    %786 = vmatprep.subr.mxu0 0.0
    %787 = vmatpush1.msra.mxu0 0.0
    %788 = vmatprep.subr.mxu0 0.0
    %789 = vmatpush1.msra.mxu0 0.0
    %790 = vmatprep.subr.mxu0 0.0
    %791 = vmatpush1.msra.mxu0 0.0
    %792 = vmatprep.subr.mxu0 0.0
    %793 = vmatpush1.msra.mxu0 0.0
    %794 = vmatprep.subr.mxu0 0.0
    %795 = vmatpush1.msra.mxu0 0.0
    %796 = vmatprep.subr.mxu0 0.0
    %797 = vmatpush1.msra.mxu0 0.0
    %798 = vmatprep.subr.mxu0 0.0
    %799 = vmatpush1.msra.mxu0 0.0
    %800 = vmatprep.subr.mxu0 0.0
    %801 = vmatpush1.msra.mxu0 0.0
    %802 = vmatprep.subr.mxu0 0.0
    %803 = vmatpush1.msra.mxu0 0.0
    %804 = vmatprep.subr.mxu0 0.0
    %805 = vmatpush1.msra.mxu0 0.0
    %806 = vmatprep.subr.mxu0 0.0
    %807 = vmatpush1.msra.mxu0 0.0
    %808 = vmatprep.subr.mxu0 0.0
    %809 = vmatpush1.msra.mxu0 0.0
    %810 = vmatprep.subr.mxu0 0.0
    %811 = vmatpush1.msra.mxu0 0.0
    %812 = vmatprep.subr.mxu0 0.0
    %813 = vmatpush1.msra.mxu0 0.0
    %814 = vmatprep.subr.mxu0 %v578
    %815 = vmatpush1.msra.mxu0 %v491
    %816 = vmatprep.subr.mxu0 %v572
    %817 = vmatpush1.msra.mxu0 %v485
    %818 = vmatprep.subr.mxu0 0.0
    %819 = vmatpush2.msra.mxu0 0.0
    %820 = vmatprep.subr.mxu0 0.0
    %821 = vmatpush2.msra.mxu0 0.0
    %822 = vmatprep.subr.mxu0 0.0
    %823 = vmatpush2.msra.mxu0 0.0
    %824 = vmatprep.subr.mxu0 0.0
    %825 = vmatpush2.msra.mxu0 0.0
    %826 = vmatprep.subr.mxu0 0.0
    %827 = vmatpush2.msra.mxu0 0.0
    %828 = vmatprep.subr.mxu0 0.0
    %829 = vmatpush2.msra.mxu0 0.0
    %830 = vmatprep.subr.mxu0 0.0
    %831 = vmatpush2.msra.mxu0 0.0
    %832 = vmatprep.subr.mxu0 0.0
    %833 = vmatpush2.msra.mxu0 0.0
    %834 = vmatprep.subr.mxu0 0.0
    %835 = vmatpush2.msra.mxu0 0.0
    %836 = vmatprep.subr.mxu0 0.0
    %837 = vmatpush2.msra.mxu0 0.0
    %838 = vmatprep.subr.mxu0 0.0
    %839 = vmatpush2.msra.mxu0 0.0
    %840 = vmatprep.subr.mxu0 0.0
    %841 = vmatpush2.msra.mxu0 0.0
    %842 = vmatprep.subr.mxu0 0.0
    %843 = vmatpush2.msra.mxu0 0.0
    %844 = vmatprep.subr.mxu0 0.0
    %845 = vmatpush2.msra.mxu0 0.0
    %846 = vmatprep.subr.mxu0 0.0
    %847 = vmatpush2.msra.mxu0 0.0
    %848 = vmatprep.subr.mxu0 0.0
    %849 = vmatpush2.msra.mxu0 0.0
    %850 = vmatprep.mubr.f32.mxu0 0.0
    %851 = vmatmul.mubr.f32.gmra.mxu0 %v781
    %v852 = vpop.f32.mrf.mxu0
    %v853 = vadd.f32 0.0, %v852
    %v854 = vpop.f32.mrf.mxu0
    %v855 = vadd.f32 0.0, %v854
    %856 = vmatprep.mubr.f32.mxu0 0.0
    %857 = vmatmul.mubr.f32.gmra.mxu0 %v784
    %v858 = vpop.f32.mrf.mxu0
    %v859 = vadd.f32 0.0, %v858
    %v860 = vpop.f32.mrf.mxu0
    %v861 = vadd.f32 0.0, %v860
    %862 = vdwg.mxu0
    %863 = vmatprep.subr.mxu0 0.0
    %864 = vmatpush1.msra.mxu0 0.0
    %865 = vmatprep.subr.mxu0 0.0
    %866 = vmatpush1.msra.mxu0 0.0
    %867 = vmatprep.subr.mxu0 0.0
    %868 = vmatpush1.msra.mxu0 0.0
    %869 = vmatprep.subr.mxu0 0.0
    %870 = vmatpush1.msra.mxu0 0.0
    %871 = vmatprep.subr.mxu0 0.0
    %872 = vmatpush1.msra.mxu0 0.0
    %873 = vmatprep.subr.mxu0 0.0
    %874 = vmatpush1.msra.mxu0 0.0
    %875 = vmatprep.subr.mxu0 0.0
    %876 = vmatpush1.msra.mxu0 0.0
    %877 = vmatprep.subr.mxu0 0.0
    %878 = vmatpush1.msra.mxu0 0.0
    %879 = vmatprep.subr.mxu0 0.0
    %880 = vmatpush1.msra.mxu0 0.0
    %881 = vmatprep.subr.mxu0 0.0
    %882 = vmatpush1.msra.mxu0 0.0
    %883 = vmatprep.subr.mxu0 0.0
    %884 = vmatpush1.msra.mxu0 0.0
    %885 = vmatprep.subr.mxu0 0.0
    %886 = vmatpush1.msra.mxu0 0.0
    %887 = vmatprep.subr.mxu0 0.0
    %888 = vmatpush1.msra.mxu0 0.0
    %889 = vmatprep.subr.mxu0 0.0
    %890 = vmatpush1.msra.mxu0 0.0
    %891 = vmatprep.subr.mxu0 0.0
    %892 = vmatpush1.msra.mxu0 %v580
    %893 = vmatprep.subr.mxu0 0.0
    %894 = vmatpush1.msra.mxu0 %v574
    %895 = vmatprep.subr.mxu0 0.0
    %896 = vmatpush2.msra.mxu0 0.0
    %897 = vmatprep.subr.mxu0 0.0
    %898 = vmatpush2.msra.mxu0 0.0
    %899 = vmatprep.subr.mxu0 0.0
    %900 = vmatpush2.msra.mxu0 0.0
    %901 = vmatprep.subr.mxu0 0.0
    %902 = vmatpush2.msra.mxu0 0.0
    %903 = vmatprep.subr.mxu0 0.0
    %904 = vmatpush2.msra.mxu0 0.0
    %905 = vmatprep.subr.mxu0 0.0
    %906 = vmatpush2.msra.mxu0 0.0
    %907 = vmatprep.subr.mxu0 0.0
    %908 = vmatpush2.msra.mxu0 0.0
    %909 = vmatprep.subr.mxu0 0.0
    %910 = vmatpush2.msra.mxu0 0.0
    %911 = vmatprep.subr.mxu0 0.0
    %912 = vmatpush2.msra.mxu0 0.0
    %913 = vmatprep.subr.mxu0 0.0
    %914 = vmatpush2.msra.mxu0 0.0
    %915 = vmatprep.subr.mxu0 0.0
    %916 = vmatpush2.msra.mxu0 0.0
    %917 = vmatprep.subr.mxu0 0.0
    %918 = vmatpush2.msra.mxu0 0.0
    %919 = vmatprep.subr.mxu0 0.0
    %920 = vmatpush2.msra.mxu0 0.0
    %921 = vmatprep.subr.mxu0 0.0
    %922 = vmatpush2.msra.mxu0 0.0
    %923 = vmatprep.subr.mxu0 0.0
    %924 = vmatpush2.msra.mxu0 0.0
    %925 = vmatprep.subr.mxu0 0.0
    %926 = vmatpush2.msra.mxu0 0.0
    %927 = vmatprep.mubr.f32.mxu0 0.0
    %928 = vmatmul.mubr.f32.gmra.mxu0 %v781
    %v929 = vpop.f32.mrf.mxu0
    %v930 = vadd.f32 0.0, %v929
    %v931 = vpop.f32.mrf.mxu0
    %932 = vmatprep.mubr.f32.mxu0 0.0
    %933 = vmatmul.mubr.f32.gmra.mxu0 %v784
    %v934 = vpop.f32.mrf.mxu0
    %v935 = vadd.f32 0.0, %v934
    %v936 = vpop.f32.mrf.mxu0
    %937 = vdwg.mxu0
    %v939 = vsel %vm185, %v36, 0
    %v942 = vsel %vm185, %v37, 0
    %944 = vmatprep.subr.mxu0 0.0
    %945 = vmatpush1.msra.mxu0 0.0
    %946 = vmatprep.subr.mxu0 0.0
    %947 = vmatpush1.msra.mxu0 0.0
    %948 = vmatprep.subr.mxu0 0.0
    %949 = vmatpush1.msra.mxu0 0.0
    %950 = vmatprep.subr.mxu0 0.0
    %951 = vmatpush1.msra.mxu0 0.0
    %952 = vmatprep.subr.mxu0 0.0
    %953 = vmatpush1.msra.mxu0 0.0
    %954 = vmatprep.subr.mxu0 0.0
    %955 = vmatpush1.msra.mxu0 0.0
    %956 = vmatprep.subr.mxu0 0.0
    %957 = vmatpush1.msra.mxu0 0.0
    %958 = vmatprep.subr.mxu0 0.0
    %959 = vmatpush1.msra.mxu0 0.0
    %960 = vmatprep.subr.mxu0 0.0
    %961 = vmatpush1.msra.mxu0 0.0
    %962 = vmatprep.subr.mxu0 0.0
    %963 = vmatpush1.msra.mxu0 0.0
    %964 = vmatprep.subr.mxu0 0.0
    %965 = vmatpush1.msra.mxu0 0.0
    %966 = vmatprep.subr.mxu0 0.0
    %967 = vmatpush1.msra.mxu0 0.0
    %968 = vmatprep.subr.mxu0 0.0
    %969 = vmatpush1.msra.mxu0 0.0
    %970 = vmatprep.subr.mxu0 0.0
    %971 = vmatpush1.msra.mxu0 0.0
    %972 = vmatprep.subr.mxu0 %v590
    %973 = vmatpush1.msra.mxu0 %v503
    %974 = vmatprep.subr.mxu0 %v584
    %975 = vmatpush1.msra.mxu0 %v497
    %976 = vmatprep.subr.mxu0 0.0
    %977 = vmatpush2.msra.mxu0 0.0
    %978 = vmatprep.subr.mxu0 0.0
    %979 = vmatpush2.msra.mxu0 0.0
    %980 = vmatprep.subr.mxu0 0.0
    %981 = vmatpush2.msra.mxu0 0.0
    %982 = vmatprep.subr.mxu0 0.0
    %983 = vmatpush2.msra.mxu0 0.0
    %984 = vmatprep.subr.mxu0 0.0
    %985 = vmatpush2.msra.mxu0 0.0
    %986 = vmatprep.subr.mxu0 0.0
    %987 = vmatpush2.msra.mxu0 0.0
    %988 = vmatprep.subr.mxu0 0.0
    %989 = vmatpush2.msra.mxu0 0.0
    %990 = vmatprep.subr.mxu0 0.0
    %991 = vmatpush2.msra.mxu0 0.0
    %992 = vmatprep.subr.mxu0 0.0
    %993 = vmatpush2.msra.mxu0 0.0
    %994 = vmatprep.subr.mxu0 0.0
    %995 = vmatpush2.msra.mxu0 0.0
    %996 = vmatprep.subr.mxu0 0.0
    %997 = vmatpush2.msra.mxu0 0.0
    %998 = vmatprep.subr.mxu0 0.0
    %999 = vmatpush2.msra.mxu0 0.0
    %1000 = vmatprep.subr.mxu0 0.0
    %1001 = vmatpush2.msra.mxu0 0.0
    %1002 = vmatprep.subr.mxu0 0.0
    %1003 = vmatpush2.msra.mxu0 0.0
    %1004 = vmatprep.subr.mxu0 0.0
    %1005 = vmatpush2.msra.mxu0 0.0
    %1006 = vmatprep.subr.mxu0 0.0
    %1007 = vmatpush2.msra.mxu0 0.0
    %1008 = vmatprep.mubr.f32.mxu0 0.0
    %1009 = vmatmul.mubr.f32.gmra.mxu0 %v939
    %v1010 = vpop.f32.mrf.mxu0
    %v1011 = vadd.f32 0.0, %v1010
    %v1012 = vpop.f32.mrf.mxu0
    %v1013 = vadd.f32 0.0, %v1012
    %1014 = vmatprep.mubr.f32.mxu0 0.0
    %1015 = vmatmul.mubr.f32.gmra.mxu0 %v942
    %v1016 = vpop.f32.mrf.mxu0
    %v1017 = vadd.f32 0.0, %v1016
    %v1018 = vpop.f32.mrf.mxu0
    %v1019 = vadd.f32 0.0, %v1018
    %1020 = vdwg.mxu0
    %1021 = vmatprep.subr.mxu0 0.0
    %1022 = vmatpush1.msra.mxu0 0.0
    %1023 = vmatprep.subr.mxu0 0.0
    %1024 = vmatpush1.msra.mxu0 0.0
    %1025 = vmatprep.subr.mxu0 0.0
    %1026 = vmatpush1.msra.mxu0 0.0
    %1027 = vmatprep.subr.mxu0 0.0
    %1028 = vmatpush1.msra.mxu0 0.0
    %1029 = vmatprep.subr.mxu0 0.0
    %1030 = vmatpush1.msra.mxu0 0.0
    %1031 = vmatprep.subr.mxu0 0.0
    %1032 = vmatpush1.msra.mxu0 0.0
    %1033 = vmatprep.subr.mxu0 0.0
    %1034 = vmatpush1.msra.mxu0 0.0
    %1035 = vmatprep.subr.mxu0 0.0
    %1036 = vmatpush1.msra.mxu0 0.0
    %1037 = vmatprep.subr.mxu0 0.0
    %1038 = vmatpush1.msra.mxu0 0.0
    %1039 = vmatprep.subr.mxu0 0.0
    %1040 = vmatpush1.msra.mxu0 0.0
    %1041 = vmatprep.subr.mxu0 0.0
    %1042 = vmatpush1.msra.mxu0 0.0
    %1043 = vmatprep.subr.mxu0 0.0
    %1044 = vmatpush1.msra.mxu0 0.0
    %1045 = vmatprep.subr.mxu0 0.0
    %1046 = vmatpush1.msra.mxu0 0.0
    %1047 = vmatprep.subr.mxu0 0.0
    %1048 = vmatpush1.msra.mxu0 0.0
    %1049 = vmatprep.subr.mxu0 0.0
    %1050 = vmatpush1.msra.mxu0 %v592
    %1051 = vmatprep.subr.mxu0 0.0
    %1052 = vmatpush1.msra.mxu0 %v586
    %1053 = vmatprep.subr.mxu0 0.0
    %1054 = vmatpush2.msra.mxu0 0.0
    %1055 = vmatprep.subr.mxu0 0.0
    %1056 = vmatpush2.msra.mxu0 0.0
    %1057 = vmatprep.subr.mxu0 0.0
    %1058 = vmatpush2.msra.mxu0 0.0
    %1059 = vmatprep.subr.mxu0 0.0
    %1060 = vmatpush2.msra.mxu0 0.0
    %1061 = vmatprep.subr.mxu0 0.0
    %1062 = vmatpush2.msra.mxu0 0.0
    %1063 = vmatprep.subr.mxu0 0.0
    %1064 = vmatpush2.msra.mxu0 0.0
    %1065 = vmatprep.subr.mxu0 0.0
    %1066 = vmatpush2.msra.mxu0 0.0
    %1067 = vmatprep.subr.mxu0 0.0
    %1068 = vmatpush2.msra.mxu0 0.0
    %1069 = vmatprep.subr.mxu0 0.0
    %1070 = vmatpush2.msra.mxu0 0.0
    %1071 = vmatprep.subr.mxu0 0.0
    %1072 = vmatpush2.msra.mxu0 0.0
    %1073 = vmatprep.subr.mxu0 0.0
    %1074 = vmatpush2.msra.mxu0 0.0
    %1075 = vmatprep.subr.mxu0 0.0
    %1076 = vmatpush2.msra.mxu0 0.0
    %1077 = vmatprep.subr.mxu0 0.0
    %1078 = vmatpush2.msra.mxu0 0.0
    %1079 = vmatprep.subr.mxu0 0.0
    %1080 = vmatpush2.msra.mxu0 0.0
    %1081 = vmatprep.subr.mxu0 0.0
    %1082 = vmatpush2.msra.mxu0 0.0
    %1083 = vmatprep.subr.mxu0 0.0
    %1084 = vmatpush2.msra.mxu0 0.0
    %1085 = vmatprep.mubr.f32.mxu0 0.0
    %1086 = vmatmul.mubr.f32.gmra.mxu0 %v939
    %v1087 = vpop.f32.mrf.mxu0
    %v1088 = vadd.f32 0.0, %v1087
    %v1089 = vpop.f32.mrf.mxu0
    %1090 = vmatprep.mubr.f32.mxu0 0.0
    %1091 = vmatmul.mubr.f32.gmra.mxu0 %v942
    %v1092 = vpop.f32.mrf.mxu0
    %v1093 = vadd.f32 0.0, %v1092
    %v1094 = vpop.f32.mrf.mxu0
    %1095 = vdwg.mxu0
    %v1097 = vsel %vm185, %v30, 0
    %v1100 = vsel %vm185, %v31, 0
    %1102 = vmatprep.subr.mxu0 0.0
    %1103 = vmatpush1.msra.mxu0 0.0
    %1104 = vmatprep.subr.mxu0 0.0
    %1105 = vmatpush1.msra.mxu0 0.0
    %1106 = vmatprep.subr.mxu0 0.0
    %1107 = vmatpush1.msra.mxu0 0.0
    %1108 = vmatprep.subr.mxu0 0.0
    %1109 = vmatpush1.msra.mxu0 0.0
    %1110 = vmatprep.subr.mxu0 0.0
    %1111 = vmatpush1.msra.mxu0 0.0
    %1112 = vmatprep.subr.mxu0 0.0
    %1113 = vmatpush1.msra.mxu0 0.0
    %1114 = vmatprep.subr.mxu0 0.0
    %1115 = vmatpush1.msra.mxu0 0.0
    %1116 = vmatprep.subr.mxu0 0.0
    %1117 = vmatpush1.msra.mxu0 0.0
    %1118 = vmatprep.subr.mxu0 0.0
    %1119 = vmatpush1.msra.mxu0 0.0
    %1120 = vmatprep.subr.mxu0 0.0
    %1121 = vmatpush1.msra.mxu0 0.0
    %1122 = vmatprep.subr.mxu0 0.0
    %1123 = vmatpush1.msra.mxu0 0.0
    %1124 = vmatprep.subr.mxu0 0.0
    %1125 = vmatpush1.msra.mxu0 0.0
    %1126 = vmatprep.subr.mxu0 0.0
    %1127 = vmatpush1.msra.mxu0 0.0
    %1128 = vmatprep.subr.mxu0 0.0
    %1129 = vmatpush1.msra.mxu0 0.0
    %1130 = vmatprep.subr.mxu0 %v402
    %1131 = vmatpush1.msra.mxu0 %v400
    %1132 = vmatprep.subr.mxu0 %v396
    %1133 = vmatpush1.msra.mxu0 %v394
    %1134 = vmatprep.subr.mxu0 0.0
    %1135 = vmatpush2.msra.mxu0 0.0
    %1136 = vmatprep.subr.mxu0 0.0
    %1137 = vmatpush2.msra.mxu0 0.0
    %1138 = vmatprep.subr.mxu0 0.0
    %1139 = vmatpush2.msra.mxu0 0.0
    %1140 = vmatprep.subr.mxu0 0.0
    %1141 = vmatpush2.msra.mxu0 0.0
    %1142 = vmatprep.subr.mxu0 0.0
    %1143 = vmatpush2.msra.mxu0 0.0
    %1144 = vmatprep.subr.mxu0 0.0
    %1145 = vmatpush2.msra.mxu0 0.0
    %1146 = vmatprep.subr.mxu0 0.0
    %1147 = vmatpush2.msra.mxu0 0.0
    %1148 = vmatprep.subr.mxu0 0.0
    %1149 = vmatpush2.msra.mxu0 0.0
    %1150 = vmatprep.subr.mxu0 0.0
    %1151 = vmatpush2.msra.mxu0 0.0
    %1152 = vmatprep.subr.mxu0 0.0
    %1153 = vmatpush2.msra.mxu0 0.0
    %1154 = vmatprep.subr.mxu0 0.0
    %1155 = vmatpush2.msra.mxu0 0.0
    %1156 = vmatprep.subr.mxu0 0.0
    %1157 = vmatpush2.msra.mxu0 0.0
    %1158 = vmatprep.subr.mxu0 0.0
    %1159 = vmatpush2.msra.mxu0 0.0
    %1160 = vmatprep.subr.mxu0 0.0
    %1161 = vmatpush2.msra.mxu0 0.0
    %1162 = vmatprep.subr.mxu0 0.0
    %1163 = vmatpush2.msra.mxu0 0.0
    %1164 = vmatprep.subr.mxu0 0.0
    %1165 = vmatpush2.msra.mxu0 0.0
    %1166 = vmatprep.mubr.f32.mxu0 0.0
    %1167 = vmatmul.mubr.f32.gmra.mxu0 %v1097
    %v1168 = vpop.f32.mrf.mxu0
    %v1169 = vadd.f32 %v853, %v1168
    %v1170 = vpop.f32.mrf.mxu0
    %v1171 = vadd.f32 %v855, %v1170
    %1172 = vmatprep.mubr.f32.mxu0 0.0
    %1173 = vmatmul.mubr.f32.gmra.mxu0 %v1100
    %v1174 = vpop.f32.mrf.mxu0
    %v1175 = vadd.f32 %v859, %v1174
    %v1176 = vpop.f32.mrf.mxu0
    %v1177 = vadd.f32 %v861, %v1176
    %1178 = vdwg.mxu0
    %1179 = vmatprep.subr.mxu0 0.0
    %1180 = vmatpush1.msra.mxu0 0.0
    %1181 = vmatprep.subr.mxu0 0.0
    %1182 = vmatpush1.msra.mxu0 0.0
    %1183 = vmatprep.subr.mxu0 0.0
    %1184 = vmatpush1.msra.mxu0 0.0
    %1185 = vmatprep.subr.mxu0 0.0
    %1186 = vmatpush1.msra.mxu0 0.0
    %1187 = vmatprep.subr.mxu0 0.0
    %1188 = vmatpush1.msra.mxu0 0.0
    %1189 = vmatprep.subr.mxu0 0.0
    %1190 = vmatpush1.msra.mxu0 0.0
    %1191 = vmatprep.subr.mxu0 0.0
    %1192 = vmatpush1.msra.mxu0 0.0
    %1193 = vmatprep.subr.mxu0 0.0
    %1194 = vmatpush1.msra.mxu0 0.0
    %1195 = vmatprep.subr.mxu0 0.0
    %1196 = vmatpush1.msra.mxu0 0.0
    %1197 = vmatprep.subr.mxu0 0.0
    %1198 = vmatpush1.msra.mxu0 0.0
    %1199 = vmatprep.subr.mxu0 0.0
    %1200 = vmatpush1.msra.mxu0 0.0
    %1201 = vmatprep.subr.mxu0 0.0
    %1202 = vmatpush1.msra.mxu0 0.0
    %1203 = vmatprep.subr.mxu0 0.0
    %1204 = vmatpush1.msra.mxu0 0.0
    %1205 = vmatprep.subr.mxu0 0.0
    %1206 = vmatpush1.msra.mxu0 0.0
    %1207 = vmatprep.subr.mxu0 0.0
    %1208 = vmatpush1.msra.mxu0 %v489
    %1209 = vmatprep.subr.mxu0 0.0
    %1210 = vmatpush1.msra.mxu0 %v483
    %1211 = vmatprep.subr.mxu0 0.0
    %1212 = vmatpush2.msra.mxu0 0.0
    %1213 = vmatprep.subr.mxu0 0.0
    %1214 = vmatpush2.msra.mxu0 0.0
    %1215 = vmatprep.subr.mxu0 0.0
    %1216 = vmatpush2.msra.mxu0 0.0
    %1217 = vmatprep.subr.mxu0 0.0
    %1218 = vmatpush2.msra.mxu0 0.0
    %1219 = vmatprep.subr.mxu0 0.0
    %1220 = vmatpush2.msra.mxu0 0.0
    %1221 = vmatprep.subr.mxu0 0.0
    %1222 = vmatpush2.msra.mxu0 0.0
    %1223 = vmatprep.subr.mxu0 0.0
    %1224 = vmatpush2.msra.mxu0 0.0
    %1225 = vmatprep.subr.mxu0 0.0
    %1226 = vmatpush2.msra.mxu0 0.0
    %1227 = vmatprep.subr.mxu0 0.0
    %1228 = vmatpush2.msra.mxu0 0.0
    %1229 = vmatprep.subr.mxu0 0.0
    %1230 = vmatpush2.msra.mxu0 0.0
    %1231 = vmatprep.subr.mxu0 0.0
    %1232 = vmatpush2.msra.mxu0 0.0
    %1233 = vmatprep.subr.mxu0 0.0
    %1234 = vmatpush2.msra.mxu0 0.0
    %1235 = vmatprep.subr.mxu0 0.0
    %1236 = vmatpush2.msra.mxu0 0.0
    %1237 = vmatprep.subr.mxu0 0.0
    %1238 = vmatpush2.msra.mxu0 0.0
    %1239 = vmatprep.subr.mxu0 0.0
    %1240 = vmatpush2.msra.mxu0 0.0
    %1241 = vmatprep.subr.mxu0 0.0
    %1242 = vmatpush2.msra.mxu0 0.0
    %1243 = vmatprep.mubr.f32.mxu0 0.0
    %1244 = vmatmul.mubr.f32.gmra.mxu0 %v1097
    %v1245 = vpop.f32.mrf.mxu0
    %v1246 = vadd.f32 %v930, %v1245
    %v1247 = vpop.f32.mrf.mxu0
    %1248 = vmatprep.mubr.f32.mxu0 0.0
    %1249 = vmatmul.mubr.f32.gmra.mxu0 %v1100
    %v1250 = vpop.f32.mrf.mxu0
    %v1251 = vadd.f32 %v935, %v1250
    %v1252 = vpop.f32.mrf.mxu0
    %1253 = vdwg.mxu0
    %v1255 = vsel %vm185, %v32, 0
    %v1258 = vsel %vm185, %v33, 0
    %1260 = vmatprep.subr.mxu0 0.0
    %1261 = vmatpush1.msra.mxu0 0.0
    %1262 = vmatprep.subr.mxu0 0.0
    %1263 = vmatpush1.msra.mxu0 0.0
    %1264 = vmatprep.subr.mxu0 0.0
    %1265 = vmatpush1.msra.mxu0 0.0
    %1266 = vmatprep.subr.mxu0 0.0
    %1267 = vmatpush1.msra.mxu0 0.0
    %1268 = vmatprep.subr.mxu0 0.0
    %1269 = vmatpush1.msra.mxu0 0.0
    %1270 = vmatprep.subr.mxu0 0.0
    %1271 = vmatpush1.msra.mxu0 0.0
    %1272 = vmatprep.subr.mxu0 0.0
    %1273 = vmatpush1.msra.mxu0 0.0
    %1274 = vmatprep.subr.mxu0 0.0
    %1275 = vmatpush1.msra.mxu0 0.0
    %1276 = vmatprep.subr.mxu0 0.0
    %1277 = vmatpush1.msra.mxu0 0.0
    %1278 = vmatprep.subr.mxu0 0.0
    %1279 = vmatpush1.msra.mxu0 0.0
    %1280 = vmatprep.subr.mxu0 0.0
    %1281 = vmatpush1.msra.mxu0 0.0
    %1282 = vmatprep.subr.mxu0 0.0
    %1283 = vmatpush1.msra.mxu0 0.0
    %1284 = vmatprep.subr.mxu0 0.0
    %1285 = vmatpush1.msra.mxu0 0.0
    %1286 = vmatprep.subr.mxu0 0.0
    %1287 = vmatpush1.msra.mxu0 0.0
    %1288 = vmatprep.subr.mxu0 %v414
    %1289 = vmatpush1.msra.mxu0 %v412
    %1290 = vmatprep.subr.mxu0 %v408
    %1291 = vmatpush1.msra.mxu0 %v406
    %1292 = vmatprep.subr.mxu0 0.0
    %1293 = vmatpush2.msra.mxu0 0.0
    %1294 = vmatprep.subr.mxu0 0.0
    %1295 = vmatpush2.msra.mxu0 0.0
    %1296 = vmatprep.subr.mxu0 0.0
    %1297 = vmatpush2.msra.mxu0 0.0
    %1298 = vmatprep.subr.mxu0 0.0
    %1299 = vmatpush2.msra.mxu0 0.0
    %1300 = vmatprep.subr.mxu0 0.0
    %1301 = vmatpush2.msra.mxu0 0.0
    %1302 = vmatprep.subr.mxu0 0.0
    %1303 = vmatpush2.msra.mxu0 0.0
    %1304 = vmatprep.subr.mxu0 0.0
    %1305 = vmatpush2.msra.mxu0 0.0
    %1306 = vmatprep.subr.mxu0 0.0
    %1307 = vmatpush2.msra.mxu0 0.0
    %1308 = vmatprep.subr.mxu0 0.0
    %1309 = vmatpush2.msra.mxu0 0.0
    %1310 = vmatprep.subr.mxu0 0.0
    %1311 = vmatpush2.msra.mxu0 0.0
    %1312 = vmatprep.subr.mxu0 0.0
    %1313 = vmatpush2.msra.mxu0 0.0
    %1314 = vmatprep.subr.mxu0 0.0
    %1315 = vmatpush2.msra.mxu0 0.0
    %1316 = vmatprep.subr.mxu0 0.0
    %1317 = vmatpush2.msra.mxu0 0.0
    %1318 = vmatprep.subr.mxu0 0.0
    %1319 = vmatpush2.msra.mxu0 0.0
    %1320 = vmatprep.subr.mxu0 0.0
    %1321 = vmatpush2.msra.mxu0 0.0
    %1322 = vmatprep.subr.mxu0 0.0
    %1323 = vmatpush2.msra.mxu0 0.0
    %1324 = vmatprep.mubr.f32.mxu0 0.0
    %1325 = vmatmul.mubr.f32.gmra.mxu0 %v1255
    %v1326 = vpop.f32.mrf.mxu0
    %v1327 = vadd.f32 %v1011, %v1326
    %v1328 = vpop.f32.mrf.mxu0
    %v1329 = vadd.f32 %v1013, %v1328
    %1330 = vmatprep.mubr.f32.mxu0 0.0
    %1331 = vmatmul.mubr.f32.gmra.mxu0 %v1258
    %v1332 = vpop.f32.mrf.mxu0
    %v1333 = vadd.f32 %v1017, %v1332
    %v1334 = vpop.f32.mrf.mxu0
    %v1335 = vadd.f32 %v1019, %v1334
    %1336 = vdwg.mxu0
    %1337 = vmatprep.subr.mxu0 0.0
    %1338 = vmatpush1.msra.mxu0 0.0
    %1339 = vmatprep.subr.mxu0 0.0
    %1340 = vmatpush1.msra.mxu0 0.0
    %1341 = vmatprep.subr.mxu0 0.0
    %1342 = vmatpush1.msra.mxu0 0.0
    %1343 = vmatprep.subr.mxu0 0.0
    %1344 = vmatpush1.msra.mxu0 0.0
    %1345 = vmatprep.subr.mxu0 0.0
    %1346 = vmatpush1.msra.mxu0 0.0
    %1347 = vmatprep.subr.mxu0 0.0
    %1348 = vmatpush1.msra.mxu0 0.0
    %1349 = vmatprep.subr.mxu0 0.0
    %1350 = vmatpush1.msra.mxu0 0.0
    %1351 = vmatprep.subr.mxu0 0.0
    %1352 = vmatpush1.msra.mxu0 0.0
    %1353 = vmatprep.subr.mxu0 0.0
    %1354 = vmatpush1.msra.mxu0 0.0
    %1355 = vmatprep.subr.mxu0 0.0
    %1356 = vmatpush1.msra.mxu0 0.0
    %1357 = vmatprep.subr.mxu0 0.0
    %1358 = vmatpush1.msra.mxu0 0.0
    %1359 = vmatprep.subr.mxu0 0.0
    %1360 = vmatpush1.msra.mxu0 0.0
    %1361 = vmatprep.subr.mxu0 0.0
    %1362 = vmatpush1.msra.mxu0 0.0
    %1363 = vmatprep.subr.mxu0 0.0
    %1364 = vmatpush1.msra.mxu0 0.0
    %1365 = vmatprep.subr.mxu0 0.0
    %1366 = vmatpush1.msra.mxu0 %v501
    %1367 = vmatprep.subr.mxu0 0.0
    %1368 = vmatpush1.msra.mxu0 %v495
    %1369 = vmatprep.subr.mxu0 0.0
    %1370 = vmatpush2.msra.mxu0 0.0
    %1371 = vmatprep.subr.mxu0 0.0
    %1372 = vmatpush2.msra.mxu0 0.0
    %1373 = vmatprep.subr.mxu0 0.0
    %1374 = vmatpush2.msra.mxu0 0.0
    %1375 = vmatprep.subr.mxu0 0.0
    %1376 = vmatpush2.msra.mxu0 0.0
    %1377 = vmatprep.subr.mxu0 0.0
    %1378 = vmatpush2.msra.mxu0 0.0
    %1379 = vmatprep.subr.mxu0 0.0
    %1380 = vmatpush2.msra.mxu0 0.0
    %1381 = vmatprep.subr.mxu0 0.0
    %1382 = vmatpush2.msra.mxu0 0.0
    %1383 = vmatprep.subr.mxu0 0.0
    %1384 = vmatpush2.msra.mxu0 0.0
    %1385 = vmatprep.subr.mxu0 0.0
    %1386 = vmatpush2.msra.mxu0 0.0
    %1387 = vmatprep.subr.mxu0 0.0
    %1388 = vmatpush2.msra.mxu0 0.0
    %1389 = vmatprep.subr.mxu0 0.0
    %1390 = vmatpush2.msra.mxu0 0.0
    %1391 = vmatprep.subr.mxu0 0.0
    %1392 = vmatpush2.msra.mxu0 0.0
    %1393 = vmatprep.subr.mxu0 0.0
    %1394 = vmatpush2.msra.mxu0 0.0
    %1395 = vmatprep.subr.mxu0 0.0
    %1396 = vmatpush2.msra.mxu0 0.0
    %1397 = vmatprep.subr.mxu0 0.0
    %1398 = vmatpush2.msra.mxu0 0.0
    %1399 = vmatprep.subr.mxu0 0.0
    %1400 = vmatpush2.msra.mxu0 0.0
    %1401 = vmatprep.mubr.f32.mxu0 0.0
    %1402 = vmatmul.mubr.f32.gmra.mxu0 %v1255
    %v1403 = vpop.f32.mrf.mxu0
    %v1404 = vadd.f32 %v1088, %v1403
    %v1405 = vpop.f32.mrf.mxu0
    %1406 = vmatprep.mubr.f32.mxu0 0.0
    %1407 = vmatmul.mubr.f32.gmra.mxu0 %v1258
    %v1408 = vpop.f32.mrf.mxu0
    %v1409 = vadd.f32 %v1093, %v1408
    %v1410 = vpop.f32.mrf.mxu0
    %1411 = vdwg.mxu0
    %v1412 = vadd.f32 %v1169, %v294
    %v1413 = vadd.f32 %v1171, %v295
    %v1414 = vadd.f32 %v1246, %v296
    %v1415 = vadd.f32 %v1175, %v297
    %v1416 = vadd.f32 %v1177, %v298
    %v1417 = vadd.f32 %v1251, %v299
    %v1418 = vadd.f32 %v1327, %v300
    %v1419 = vadd.f32 %v1329, %v301
    %v1420 = vadd.f32 %v1404, %v302
    %v1421 = vadd.f32 %v1333, %v303
    %v1422 = vadd.f32 %v1335, %v304
    %v1423 = vadd.f32 %v1409, %v305
    %v1424 = vadd.f32 %v1412, %v768
    %v1425 = vadd.f32 %v1415, %v771
    %v1426 = vadd.f32 %v1418, %v774
    %v1427 = vadd.f32 %v1421, %v777
    %v1428 = vxor.u32 %v1424, 2147483648
    %v1429 = vxor.u32 %v1425, 2147483648
    %v1430 = vxor.u32 %v1426, 2147483648
    %v1431 = vxor.u32 %v1427, 2147483648
    %v1432 = vmul.f32 %v1428, 1.442695
    %v1433 = vpow.pop %v1432
    %v1434 = vmul.f32 %v1429, 1.442695
    %v1435 = vpow.pop %v1434
    %v1436 = vmul.f32 %v1430, 1.442695
    %v1437 = vpow.pop %v1436
    %v1438 = vmul.f32 %v1431, 1.442695
    %v1439 = vpow.pop %v1438
    %v1440 = vadd.f32 %v1433, 1.0
    %v1441 = vadd.f32 %v1435, 1.0
    %v1442 = vadd.f32 %v1437, 1.0
    %v1443 = vadd.f32 %v1439, 1.0
    %v1444 = vrcp.pop %v1440
    %v1445 = vmul.f32 1.0, %v1444
    %v1446 = vrcp.pop %v1441
    %v1447 = vmul.f32 1.0, %v1446
    %v1448 = vrcp.pop %v1442
    %v1449 = vmul.f32 1.0, %v1448
    %v1450 = vrcp.pop %v1443
    %v1451 = vmul.f32 1.0, %v1450
    %v1452 = vadd.f32 %v1413, %v769
    %v1453 = vadd.f32 %v1416, %v772
    %v1454 = vadd.f32 %v1419, %v775
    %v1455 = vadd.f32 %v1422, %v778
    %v1456 = vxor.u32 %v1452, 2147483648
    %v1457 = vxor.u32 %v1453, 2147483648
    %v1458 = vxor.u32 %v1454, 2147483648
    %v1459 = vxor.u32 %v1455, 2147483648
    %v1460 = vmul.f32 %v1456, 1.442695
    %v1461 = vpow.pop %v1460
    %v1462 = vmul.f32 %v1457, 1.442695
    %v1463 = vpow.pop %v1462
    %v1464 = vmul.f32 %v1458, 1.442695
    %v1465 = vpow.pop %v1464
    %v1466 = vmul.f32 %v1459, 1.442695
    %v1467 = vpow.pop %v1466
    %v1468 = vadd.f32 %v1461, 1.0
    %v1469 = vadd.f32 %v1463, 1.0
    %v1470 = vadd.f32 %v1465, 1.0
    %v1471 = vadd.f32 %v1467, 1.0
    %v1472 = vrcp.pop %v1468
    %v1473 = vmul.f32 1.0, %v1472
    %v1474 = vrcp.pop %v1469
    %v1475 = vmul.f32 1.0, %v1474
    %v1476 = vrcp.pop %v1470
    %v1477 = vmul.f32 1.0, %v1476
    %v1478 = vrcp.pop %v1471
    %v1479 = vmul.f32 1.0, %v1478
    %v1480 = vmul.f32 %v1445, %v770
    %v1481 = vmul.f32 %v1447, %v773
    %v1482 = vmul.f32 %v1449, %v776
    %v1483 = vmul.f32 %v1451, %v779
    %v1484 = vadd.f32 %v1414, %v1480
    %v1485 = vadd.f32 %v1417, %v1481
    %v1486 = vadd.f32 %v1420, %v1482
    %v1487 = vadd.f32 %v1423, %v1483
    %v1488 = vtanh.pop %v1484
    %v1489 = vtanh.pop %v1485
    %v1490 = vtanh.pop %v1486
    %v1491 = vtanh.pop %v1487
    %v1492 = vsub.f32 %v323, %v1488
    %v1493 = vsub.f32 %v324, %v1489
    %v1494 = vsub.f32 %v325, %v1490
    %v1495 = vsub.f32 %v326, %v1491
    %v1496 = vmul.f32 %v1473, %v1492
    %v1497 = vmul.f32 %v1475, %v1493
    %v1498 = vmul.f32 %v1477, %v1494
    %v1499 = vmul.f32 %v1479, %v1495
    %v1500 = vadd.f32 %v1488, %v1496
    %v1501 = vadd.f32 %v1489, %v1497
    %v1502 = vadd.f32 %v1490, %v1498
    %v1503 = vadd.f32 %v1491, %v1499
    %1504 = vmatprep.subr.mxu0 %v174
    %1505 = vmatpush1.msra.mxu0 %v173
    %1506 = vmatprep.subr.mxu0 %v165
    %1507 = vmatpush1.msra.mxu0 %v164
    %1508 = vmatprep.subr.mxu0 %v156
    %1509 = vmatpush1.msra.mxu0 %v155
    %1510 = vmatprep.subr.mxu0 %v147
    %1511 = vmatpush1.msra.mxu0 %v146
    %1512 = vmatprep.subr.mxu0 %v138
    %1513 = vmatpush1.msra.mxu0 %v137
    %1514 = vmatprep.subr.mxu0 %v129
    %1515 = vmatpush1.msra.mxu0 %v128
    %1516 = vmatprep.subr.mxu0 %v120
    %1517 = vmatpush1.msra.mxu0 %v119
    %1518 = vmatprep.subr.mxu0 %v111
    %1519 = vmatpush1.msra.mxu0 %v110
    %1520 = vmatprep.subr.mxu0 %v102
    %1521 = vmatpush1.msra.mxu0 %v101
    %1522 = vmatprep.subr.mxu0 %v93
    %1523 = vmatpush1.msra.mxu0 %v92
    %1524 = vmatprep.subr.mxu0 %v84
    %1525 = vmatpush1.msra.mxu0 %v83
    %1526 = vmatprep.subr.mxu0 %v75
    %1527 = vmatpush1.msra.mxu0 %v74
    %1528 = vmatprep.subr.mxu0 %v66
    %1529 = vmatpush1.msra.mxu0 %v65
    %1530 = vmatprep.subr.mxu0 %v57
    %1531 = vmatpush1.msra.mxu0 %v56
    %1532 = vmatprep.subr.mxu0 %v48
    %1533 = vmatpush1.msra.mxu0 %v47
    %1534 = vmatprep.subr.mxu0 %v39
    %1535 = vmatpush1.msra.mxu0 %v38
    %1536 = vmatprep.subr.mxu0 0.0
    %1537 = vmatpush2.msra.mxu0 0.0
    %1538 = vmatprep.subr.mxu0 0.0
    %1539 = vmatpush2.msra.mxu0 0.0
    %1540 = vmatprep.subr.mxu0 0.0
    %1541 = vmatpush2.msra.mxu0 0.0
    %1542 = vmatprep.subr.mxu0 0.0
    %1543 = vmatpush2.msra.mxu0 0.0
    %1544 = vmatprep.subr.mxu0 0.0
    %1545 = vmatpush2.msra.mxu0 0.0
    %1546 = vmatprep.subr.mxu0 0.0
    %1547 = vmatpush2.msra.mxu0 0.0
    %1548 = vmatprep.subr.mxu0 0.0
    %1549 = vmatpush2.msra.mxu0 0.0
    %1550 = vmatprep.subr.mxu0 0.0
    %1551 = vmatpush2.msra.mxu0 0.0
    %1552 = vmatprep.subr.mxu0 0.0
    %1553 = vmatpush2.msra.mxu0 0.0
    %1554 = vmatprep.subr.mxu0 0.0
    %1555 = vmatpush2.msra.mxu0 0.0
    %1556 = vmatprep.subr.mxu0 0.0
    %1557 = vmatpush2.msra.mxu0 0.0
    %1558 = vmatprep.subr.mxu0 0.0
    %1559 = vmatpush2.msra.mxu0 0.0
    %1560 = vmatprep.subr.mxu0 0.0
    %1561 = vmatpush2.msra.mxu0 0.0
    %1562 = vmatprep.subr.mxu0 0.0
    %1563 = vmatpush2.msra.mxu0 0.0
    %1564 = vmatprep.subr.mxu0 0.0
    %1565 = vmatpush2.msra.mxu0 0.0
    %1566 = vmatprep.subr.mxu0 0.0
    %1567 = vmatpush2.msra.mxu0 0.0
    %1568 = vmatprep.mubr.f32.mxu0 0.0
    %1569 = vmatmul.mubr.f32.gmra.mxu0 %v1500
    %v1570 = vpop.f32.mrf.mxu0
    %v1571 = vadd.f32 0.0, %v1570
    %v1572 = vpop.f32.mrf.mxu0
    %v1573 = vadd.f32 0.0, %v1572
    %1574 = vmatprep.mubr.f32.mxu0 0.0
    %1575 = vmatmul.mubr.f32.gmra.mxu0 %v1501
    %v1576 = vpop.f32.mrf.mxu0
    %v1577 = vadd.f32 0.0, %v1576
    %v1578 = vpop.f32.mrf.mxu0
    %v1579 = vadd.f32 0.0, %v1578
    %1580 = vmatprep.mubr.f32.mxu0 0.0
    %1581 = vmatmul.mubr.f32.gmra.mxu0 %v1502
    %v1582 = vpop.f32.mrf.mxu0
    %v1583 = vadd.f32 0.0, %v1582
    %v1584 = vpop.f32.mrf.mxu0
    %v1585 = vadd.f32 0.0, %v1584
    %1586 = vmatprep.mubr.f32.mxu0 0.0
    %1587 = vmatmul.mubr.f32.gmra.mxu0 %v1503
    %v1588 = vpop.f32.mrf.mxu0
    %v1589 = vadd.f32 0.0, %v1588
    %v1590 = vpop.f32.mrf.mxu0
    %v1591 = vadd.f32 0.0, %v1590
    %1592 = vdwg.mxu0
    %1593 = vmatprep.subr.mxu0 %v176
    %1594 = vmatpush1.msra.mxu0 %v175
    %1595 = vmatprep.subr.mxu0 %v167
    %1596 = vmatpush1.msra.mxu0 %v166
    %1597 = vmatprep.subr.mxu0 %v158
    %1598 = vmatpush1.msra.mxu0 %v157
    %1599 = vmatprep.subr.mxu0 %v149
    %1600 = vmatpush1.msra.mxu0 %v148
    %1601 = vmatprep.subr.mxu0 %v140
    %1602 = vmatpush1.msra.mxu0 %v139
    %1603 = vmatprep.subr.mxu0 %v131
    %1604 = vmatpush1.msra.mxu0 %v130
    %1605 = vmatprep.subr.mxu0 %v122
    %1606 = vmatpush1.msra.mxu0 %v121
    %1607 = vmatprep.subr.mxu0 %v113
    %1608 = vmatpush1.msra.mxu0 %v112
    %1609 = vmatprep.subr.mxu0 %v104
    %1610 = vmatpush1.msra.mxu0 %v103
    %1611 = vmatprep.subr.mxu0 %v95
    %1612 = vmatpush1.msra.mxu0 %v94
    %1613 = vmatprep.subr.mxu0 %v86
    %1614 = vmatpush1.msra.mxu0 %v85
    %1615 = vmatprep.subr.mxu0 %v77
    %1616 = vmatpush1.msra.mxu0 %v76
    %1617 = vmatprep.subr.mxu0 %v68
    %1618 = vmatpush1.msra.mxu0 %v67
    %1619 = vmatprep.subr.mxu0 %v59
    %1620 = vmatpush1.msra.mxu0 %v58
    %1621 = vmatprep.subr.mxu0 %v50
    %1622 = vmatpush1.msra.mxu0 %v49
    %1623 = vmatprep.subr.mxu0 %v41
    %1624 = vmatpush1.msra.mxu0 %v40
    %1625 = vmatprep.subr.mxu0 0.0
    %1626 = vmatpush2.msra.mxu0 0.0
    %1627 = vmatprep.subr.mxu0 0.0
    %1628 = vmatpush2.msra.mxu0 0.0
    %1629 = vmatprep.subr.mxu0 0.0
    %1630 = vmatpush2.msra.mxu0 0.0
    %1631 = vmatprep.subr.mxu0 0.0
    %1632 = vmatpush2.msra.mxu0 0.0
    %1633 = vmatprep.subr.mxu0 0.0
    %1634 = vmatpush2.msra.mxu0 0.0
    %1635 = vmatprep.subr.mxu0 0.0
    %1636 = vmatpush2.msra.mxu0 0.0
    %1637 = vmatprep.subr.mxu0 0.0
    %1638 = vmatpush2.msra.mxu0 0.0
    %1639 = vmatprep.subr.mxu0 0.0
    %1640 = vmatpush2.msra.mxu0 0.0
    %1641 = vmatprep.subr.mxu0 0.0
    %1642 = vmatpush2.msra.mxu0 0.0
    %1643 = vmatprep.subr.mxu0 0.0
    %1644 = vmatpush2.msra.mxu0 0.0
    %1645 = vmatprep.subr.mxu0 0.0
    %1646 = vmatpush2.msra.mxu0 0.0
    %1647 = vmatprep.subr.mxu0 0.0
    %1648 = vmatpush2.msra.mxu0 0.0
    %1649 = vmatprep.subr.mxu0 0.0
    %1650 = vmatpush2.msra.mxu0 0.0
    %1651 = vmatprep.subr.mxu0 0.0
    %1652 = vmatpush2.msra.mxu0 0.0
    %1653 = vmatprep.subr.mxu0 0.0
    %1654 = vmatpush2.msra.mxu0 0.0
    %1655 = vmatprep.subr.mxu0 0.0
    %1656 = vmatpush2.msra.mxu0 0.0
    %1657 = vmatprep.mubr.f32.mxu0 0.0
    %1658 = vmatmul.mubr.f32.gmra.mxu0 %v1500
    %v1659 = vpop.f32.mrf.mxu0
    %v1660 = vadd.f32 0.0, %v1659
    %v1661 = vpop.f32.mrf.mxu0
    %v1662 = vadd.f32 0.0, %v1661
    %1663 = vmatprep.mubr.f32.mxu0 0.0
    %1664 = vmatmul.mubr.f32.gmra.mxu0 %v1501
    %v1665 = vpop.f32.mrf.mxu0
    %v1666 = vadd.f32 0.0, %v1665
    %v1667 = vpop.f32.mrf.mxu0
    %v1668 = vadd.f32 0.0, %v1667
    %1669 = vmatprep.mubr.f32.mxu0 0.0
    %1670 = vmatmul.mubr.f32.gmra.mxu0 %v1502
    %v1671 = vpop.f32.mrf.mxu0
    %v1672 = vadd.f32 0.0, %v1671
    %v1673 = vpop.f32.mrf.mxu0
    %v1674 = vadd.f32 0.0, %v1673
    %1675 = vmatprep.mubr.f32.mxu0 0.0
    %1676 = vmatmul.mubr.f32.gmra.mxu0 %v1503
    %v1677 = vpop.f32.mrf.mxu0
    %v1678 = vadd.f32 0.0, %v1677
    %v1679 = vpop.f32.mrf.mxu0
    %v1680 = vadd.f32 0.0, %v1679
    %1681 = vdwg.mxu0
    %1682 = vmatprep.subr.mxu0 %v178
    %1683 = vmatpush1.msra.mxu0 %v177
    %1684 = vmatprep.subr.mxu0 %v169
    %1685 = vmatpush1.msra.mxu0 %v168
    %1686 = vmatprep.subr.mxu0 %v160
    %1687 = vmatpush1.msra.mxu0 %v159
    %1688 = vmatprep.subr.mxu0 %v151
    %1689 = vmatpush1.msra.mxu0 %v150
    %1690 = vmatprep.subr.mxu0 %v142
    %1691 = vmatpush1.msra.mxu0 %v141
    %1692 = vmatprep.subr.mxu0 %v133
    %1693 = vmatpush1.msra.mxu0 %v132
    %1694 = vmatprep.subr.mxu0 %v124
    %1695 = vmatpush1.msra.mxu0 %v123
    %1696 = vmatprep.subr.mxu0 %v115
    %1697 = vmatpush1.msra.mxu0 %v114
    %1698 = vmatprep.subr.mxu0 %v106
    %1699 = vmatpush1.msra.mxu0 %v105
    %1700 = vmatprep.subr.mxu0 %v97
    %1701 = vmatpush1.msra.mxu0 %v96
    %1702 = vmatprep.subr.mxu0 %v88
    %1703 = vmatpush1.msra.mxu0 %v87
    %1704 = vmatprep.subr.mxu0 %v79
    %1705 = vmatpush1.msra.mxu0 %v78
    %1706 = vmatprep.subr.mxu0 %v70
    %1707 = vmatpush1.msra.mxu0 %v69
    %1708 = vmatprep.subr.mxu0 %v61
    %1709 = vmatpush1.msra.mxu0 %v60
    %1710 = vmatprep.subr.mxu0 %v52
    %1711 = vmatpush1.msra.mxu0 %v51
    %1712 = vmatprep.subr.mxu0 %v43
    %1713 = vmatpush1.msra.mxu0 %v42
    %1714 = vmatprep.subr.mxu0 0.0
    %1715 = vmatpush2.msra.mxu0 0.0
    %1716 = vmatprep.subr.mxu0 0.0
    %1717 = vmatpush2.msra.mxu0 0.0
    %1718 = vmatprep.subr.mxu0 0.0
    %1719 = vmatpush2.msra.mxu0 0.0
    %1720 = vmatprep.subr.mxu0 0.0
    %1721 = vmatpush2.msra.mxu0 0.0
    %1722 = vmatprep.subr.mxu0 0.0
    %1723 = vmatpush2.msra.mxu0 0.0
    %1724 = vmatprep.subr.mxu0 0.0
    %1725 = vmatpush2.msra.mxu0 0.0
    %1726 = vmatprep.subr.mxu0 0.0
    %1727 = vmatpush2.msra.mxu0 0.0
    %1728 = vmatprep.subr.mxu0 0.0
    %1729 = vmatpush2.msra.mxu0 0.0
    %1730 = vmatprep.subr.mxu0 0.0
    %1731 = vmatpush2.msra.mxu0 0.0
    %1732 = vmatprep.subr.mxu0 0.0
    %1733 = vmatpush2.msra.mxu0 0.0
    %1734 = vmatprep.subr.mxu0 0.0
    %1735 = vmatpush2.msra.mxu0 0.0
    %1736 = vmatprep.subr.mxu0 0.0
    %1737 = vmatpush2.msra.mxu0 0.0
    %1738 = vmatprep.subr.mxu0 0.0
    %1739 = vmatpush2.msra.mxu0 0.0
    %1740 = vmatprep.subr.mxu0 0.0
    %1741 = vmatpush2.msra.mxu0 0.0
    %1742 = vmatprep.subr.mxu0 0.0
    %1743 = vmatpush2.msra.mxu0 0.0
    %1744 = vmatprep.subr.mxu0 0.0
    %1745 = vmatpush2.msra.mxu0 0.0
    %1746 = vmatprep.mubr.f32.mxu0 0.0
    %1747 = vmatmul.mubr.f32.gmra.mxu0 %v1500
    %v1748 = vpop.f32.mrf.mxu0
    %v1749 = vadd.f32 0.0, %v1748
    %v1750 = vpop.f32.mrf.mxu0
    %v1751 = vadd.f32 0.0, %v1750
    %1752 = vmatprep.mubr.f32.mxu0 0.0
    %1753 = vmatmul.mubr.f32.gmra.mxu0 %v1501
    %v1754 = vpop.f32.mrf.mxu0
    %v1755 = vadd.f32 0.0, %v1754
    %v1756 = vpop.f32.mrf.mxu0
    %v1757 = vadd.f32 0.0, %v1756
    %1758 = vmatprep.mubr.f32.mxu0 0.0
    %1759 = vmatmul.mubr.f32.gmra.mxu0 %v1502
    %v1760 = vpop.f32.mrf.mxu0
    %v1761 = vadd.f32 0.0, %v1760
    %v1762 = vpop.f32.mrf.mxu0
    %v1763 = vadd.f32 0.0, %v1762
    %1764 = vmatprep.mubr.f32.mxu0 0.0
    %1765 = vmatmul.mubr.f32.gmra.mxu0 %v1503
    %v1766 = vpop.f32.mrf.mxu0
    %v1767 = vadd.f32 0.0, %v1766
    %v1768 = vpop.f32.mrf.mxu0
    %v1769 = vadd.f32 0.0, %v1768
    %1770 = vdwg.mxu0
    %1771 = vmatprep.subr.mxu0 %v180
    %1772 = vmatpush1.msra.mxu0 %v179
    %1773 = vmatprep.subr.mxu0 %v171
    %1774 = vmatpush1.msra.mxu0 %v170
    %1775 = vmatprep.subr.mxu0 %v162
    %1776 = vmatpush1.msra.mxu0 %v161
    %1777 = vmatprep.subr.mxu0 %v153
    %1778 = vmatpush1.msra.mxu0 %v152
    %1779 = vmatprep.subr.mxu0 %v144
    %1780 = vmatpush1.msra.mxu0 %v143
    %1781 = vmatprep.subr.mxu0 %v135
    %1782 = vmatpush1.msra.mxu0 %v134
    %1783 = vmatprep.subr.mxu0 %v126
    %1784 = vmatpush1.msra.mxu0 %v125
    %1785 = vmatprep.subr.mxu0 %v117
    %1786 = vmatpush1.msra.mxu0 %v116
    %1787 = vmatprep.subr.mxu0 %v108
    %1788 = vmatpush1.msra.mxu0 %v107
    %1789 = vmatprep.subr.mxu0 %v99
    %1790 = vmatpush1.msra.mxu0 %v98
    %1791 = vmatprep.subr.mxu0 %v90
    %1792 = vmatpush1.msra.mxu0 %v89
    %1793 = vmatprep.subr.mxu0 %v81
    %1794 = vmatpush1.msra.mxu0 %v80
    %1795 = vmatprep.subr.mxu0 %v72
    %1796 = vmatpush1.msra.mxu0 %v71
    %1797 = vmatprep.subr.mxu0 %v63
    %1798 = vmatpush1.msra.mxu0 %v62
    %1799 = vmatprep.subr.mxu0 %v54
    %1800 = vmatpush1.msra.mxu0 %v53
    %1801 = vmatprep.subr.mxu0 %v45
    %1802 = vmatpush1.msra.mxu0 %v44
    %1803 = vmatprep.subr.mxu0 0.0
    %1804 = vmatpush2.msra.mxu0 0.0
    %1805 = vmatprep.subr.mxu0 0.0
    %1806 = vmatpush2.msra.mxu0 0.0
    %1807 = vmatprep.subr.mxu0 0.0
    %1808 = vmatpush2.msra.mxu0 0.0
    %1809 = vmatprep.subr.mxu0 0.0
    %1810 = vmatpush2.msra.mxu0 0.0
    %1811 = vmatprep.subr.mxu0 0.0
    %1812 = vmatpush2.msra.mxu0 0.0
    %1813 = vmatprep.subr.mxu0 0.0
    %1814 = vmatpush2.msra.mxu0 0.0
    %1815 = vmatprep.subr.mxu0 0.0
    %1816 = vmatpush2.msra.mxu0 0.0
    %1817 = vmatprep.subr.mxu0 0.0
    %1818 = vmatpush2.msra.mxu0 0.0
    %1819 = vmatprep.subr.mxu0 0.0
    %1820 = vmatpush2.msra.mxu0 0.0
    %1821 = vmatprep.subr.mxu0 0.0
    %1822 = vmatpush2.msra.mxu0 0.0
    %1823 = vmatprep.subr.mxu0 0.0
    %1824 = vmatpush2.msra.mxu0 0.0
    %1825 = vmatprep.subr.mxu0 0.0
    %1826 = vmatpush2.msra.mxu0 0.0
    %1827 = vmatprep.subr.mxu0 0.0
    %1828 = vmatpush2.msra.mxu0 0.0
    %1829 = vmatprep.subr.mxu0 0.0
    %1830 = vmatpush2.msra.mxu0 0.0
    %1831 = vmatprep.subr.mxu0 0.0
    %1832 = vmatpush2.msra.mxu0 0.0
    %1833 = vmatprep.subr.mxu0 0.0
    %1834 = vmatpush2.msra.mxu0 0.0
    %1835 = vmatprep.mubr.f32.mxu0 0.0
    %1836 = vmatmul.mubr.f32.gmra.mxu0 %v1500
    %v1837 = vpop.f32.mrf.mxu0
    %v1838 = vadd.f32 0.0, %v1837
    %v1839 = vpop.f32.mrf.mxu0
    %v1840 = vadd.f32 0.0, %v1839
    %1841 = vmatprep.mubr.f32.mxu0 0.0
    %1842 = vmatmul.mubr.f32.gmra.mxu0 %v1501
    %v1843 = vpop.f32.mrf.mxu0
    %v1844 = vadd.f32 0.0, %v1843
    %v1845 = vpop.f32.mrf.mxu0
    %v1846 = vadd.f32 0.0, %v1845
    %1847 = vmatprep.mubr.f32.mxu0 0.0
    %1848 = vmatmul.mubr.f32.gmra.mxu0 %v1502
    %v1849 = vpop.f32.mrf.mxu0
    %v1850 = vadd.f32 0.0, %v1849
    %v1851 = vpop.f32.mrf.mxu0
    %v1852 = vadd.f32 0.0, %v1851
    %1853 = vmatprep.mubr.f32.mxu0 0.0
    %1854 = vmatmul.mubr.f32.gmra.mxu0 %v1503
    %v1855 = vpop.f32.mrf.mxu0
    %v1856 = vadd.f32 0.0, %v1855
    %v1857 = vpop.f32.mrf.mxu0
    %v1858 = vadd.f32 0.0, %v1857
    %1859 = vdwg.mxu0
    %1860 = vmatprep.subr.mxu0 0.0
    %1861 = vmatpush1.msra.mxu0 %v181
    %1862 = vmatprep.subr.mxu0 0.0
    %1863 = vmatpush1.msra.mxu0 %v172
    %1864 = vmatprep.subr.mxu0 0.0
    %1865 = vmatpush1.msra.mxu0 %v163
    %1866 = vmatprep.subr.mxu0 0.0
    %1867 = vmatpush1.msra.mxu0 %v154
    %1868 = vmatprep.subr.mxu0 0.0
    %1869 = vmatpush1.msra.mxu0 %v145
    %1870 = vmatprep.subr.mxu0 0.0
    %1871 = vmatpush1.msra.mxu0 %v136
    %1872 = vmatprep.subr.mxu0 0.0
    %1873 = vmatpush1.msra.mxu0 %v127
    %1874 = vmatprep.subr.mxu0 0.0
    %1875 = vmatpush1.msra.mxu0 %v118
    %1876 = vmatprep.subr.mxu0 0.0
    %1877 = vmatpush1.msra.mxu0 %v109
    %1878 = vmatprep.subr.mxu0 0.0
    %1879 = vmatpush1.msra.mxu0 %v100
    %1880 = vmatprep.subr.mxu0 0.0
    %1881 = vmatpush1.msra.mxu0 %v91
    %1882 = vmatprep.subr.mxu0 0.0
    %1883 = vmatpush1.msra.mxu0 %v82
    %1884 = vmatprep.subr.mxu0 0.0
    %1885 = vmatpush1.msra.mxu0 %v73
    %1886 = vmatprep.subr.mxu0 0.0
    %1887 = vmatpush1.msra.mxu0 %v64
    %1888 = vmatprep.subr.mxu0 0.0
    %1889 = vmatpush1.msra.mxu0 %v55
    %1890 = vmatprep.subr.mxu0 0.0
    %1891 = vmatpush1.msra.mxu0 %v46
    %1892 = vmatprep.subr.mxu0 0.0
    %1893 = vmatpush2.msra.mxu0 0.0
    %1894 = vmatprep.subr.mxu0 0.0
    %1895 = vmatpush2.msra.mxu0 0.0
    %1896 = vmatprep.subr.mxu0 0.0
    %1897 = vmatpush2.msra.mxu0 0.0
    %1898 = vmatprep.subr.mxu0 0.0
    %1899 = vmatpush2.msra.mxu0 0.0
    %1900 = vmatprep.subr.mxu0 0.0
    %1901 = vmatpush2.msra.mxu0 0.0
    %1902 = vmatprep.subr.mxu0 0.0
    %1903 = vmatpush2.msra.mxu0 0.0
    %1904 = vmatprep.subr.mxu0 0.0
    %1905 = vmatpush2.msra.mxu0 0.0
    %1906 = vmatprep.subr.mxu0 0.0
    %1907 = vmatpush2.msra.mxu0 0.0
    %1908 = vmatprep.subr.mxu0 0.0
    %1909 = vmatpush2.msra.mxu0 0.0
    %1910 = vmatprep.subr.mxu0 0.0
    %1911 = vmatpush2.msra.mxu0 0.0
    %1912 = vmatprep.subr.mxu0 0.0
    %1913 = vmatpush2.msra.mxu0 0.0
    %1914 = vmatprep.subr.mxu0 0.0
    %1915 = vmatpush2.msra.mxu0 0.0
    %1916 = vmatprep.subr.mxu0 0.0
    %1917 = vmatpush2.msra.mxu0 0.0
    %1918 = vmatprep.subr.mxu0 0.0
    %1919 = vmatpush2.msra.mxu0 0.0
    %1920 = vmatprep.subr.mxu0 0.0
    %1921 = vmatpush2.msra.mxu0 0.0
    %1922 = vmatprep.subr.mxu0 0.0
    %1923 = vmatpush2.msra.mxu0 0.0
    %1924 = vmatprep.mubr.f32.mxu0 0.0
    %1925 = vmatmul.mubr.f32.gmra.mxu0 %v1500
    %v1926 = vpop.f32.mrf.mxu0
    %v1927 = vadd.f32 0.0, %v1926
    %v1928 = vpop.f32.mrf.mxu0
    %1929 = vmatprep.mubr.f32.mxu0 0.0
    %1930 = vmatmul.mubr.f32.gmra.mxu0 %v1501
    %v1931 = vpop.f32.mrf.mxu0
    %v1932 = vadd.f32 0.0, %v1931
    %v1933 = vpop.f32.mrf.mxu0
    %1934 = vmatprep.mubr.f32.mxu0 0.0
    %1935 = vmatmul.mubr.f32.gmra.mxu0 %v1502
    %v1936 = vpop.f32.mrf.mxu0
    %v1937 = vadd.f32 0.0, %v1936
    %v1938 = vpop.f32.mrf.mxu0
    %1939 = vmatprep.mubr.f32.mxu0 0.0
    %1940 = vmatmul.mubr.f32.gmra.mxu0 %v1503
    %v1941 = vpop.f32.mrf.mxu0
    %v1942 = vadd.f32 0.0, %v1941
    %v1943 = vpop.f32.mrf.mxu0
    %1944 = vdwg.mxu0
    %v1945 = vadd.f32 %v1838, %v311
    %v1946 = vadd.f32 %v1840, %v315
    %v1947 = vadd.f32 %v1927, %v319
    %v1948 = vadd.f32 %v1844, %v311
    %v1949 = vadd.f32 %v1846, %v315
    %v1950 = vadd.f32 %v1932, %v319
    %v1951 = vadd.f32 %v1850, %v311
    %v1952 = vadd.f32 %v1852, %v315
    %v1953 = vadd.f32 %v1937, %v319
    %v1954 = vadd.f32 %v1856, %v311
    %v1955 = vadd.f32 %v1858, %v315
    %v1956 = vadd.f32 %v1942, %v319
    %1957 = vmatprep.subr.mxu0 0.0
    %1958 = vmatpush1.msra.mxu0 0.0
    %1959 = vmatprep.subr.mxu0 0.0
    %1960 = vmatpush1.msra.mxu0 0.0
    %1961 = vmatprep.subr.mxu0 0.0
    %1962 = vmatpush1.msra.mxu0 0.0
    %1963 = vmatprep.subr.mxu0 0.0
    %1964 = vmatpush1.msra.mxu0 0.0
    %1965 = vmatprep.subr.mxu0 0.0
    %1966 = vmatpush1.msra.mxu0 0.0
    %1967 = vmatprep.subr.mxu0 0.0
    %1968 = vmatpush1.msra.mxu0 0.0
    %1969 = vmatprep.subr.mxu0 0.0
    %1970 = vmatpush1.msra.mxu0 0.0
    %1971 = vmatprep.subr.mxu0 0.0
    %1972 = vmatpush1.msra.mxu0 0.0
    %1973 = vmatprep.subr.mxu0 0.0
    %1974 = vmatpush1.msra.mxu0 0.0
    %1975 = vmatprep.subr.mxu0 0.0
    %1976 = vmatpush1.msra.mxu0 0.0
    %1977 = vmatprep.subr.mxu0 0.0
    %1978 = vmatpush1.msra.mxu0 0.0
    %1979 = vmatprep.subr.mxu0 0.0
    %1980 = vmatpush1.msra.mxu0 0.0
    %1981 = vmatprep.subr.mxu0 0.0
    %1982 = vmatpush1.msra.mxu0 0.0
    %1983 = vmatprep.subr.mxu0 0.0
    %1984 = vmatpush1.msra.mxu0 0.0
    %1985 = vmatprep.subr.mxu0 %v1755
    %1986 = vmatpush1.msra.mxu0 %v1668
    %1987 = vmatprep.subr.mxu0 %v1749
    %1988 = vmatpush1.msra.mxu0 %v1662
    %1989 = vmatprep.subr.mxu0 0.0
    %1990 = vmatpush2.msra.mxu0 0.0
    %1991 = vmatprep.subr.mxu0 0.0
    %1992 = vmatpush2.msra.mxu0 0.0
    %1993 = vmatprep.subr.mxu0 0.0
    %1994 = vmatpush2.msra.mxu0 0.0
    %1995 = vmatprep.subr.mxu0 0.0
    %1996 = vmatpush2.msra.mxu0 0.0
    %1997 = vmatprep.subr.mxu0 0.0
    %1998 = vmatpush2.msra.mxu0 0.0
    %1999 = vmatprep.subr.mxu0 0.0
    %2000 = vmatpush2.msra.mxu0 0.0
    %2001 = vmatprep.subr.mxu0 0.0
    %2002 = vmatpush2.msra.mxu0 0.0
    %2003 = vmatprep.subr.mxu0 0.0
    %2004 = vmatpush2.msra.mxu0 0.0
    %2005 = vmatprep.subr.mxu0 0.0
    %2006 = vmatpush2.msra.mxu0 0.0
    %2007 = vmatprep.subr.mxu0 0.0
    %2008 = vmatpush2.msra.mxu0 0.0
    %2009 = vmatprep.subr.mxu0 0.0
    %2010 = vmatpush2.msra.mxu0 0.0
    %2011 = vmatprep.subr.mxu0 0.0
    %2012 = vmatpush2.msra.mxu0 0.0
    %2013 = vmatprep.subr.mxu0 0.0
    %2014 = vmatpush2.msra.mxu0 0.0
    %2015 = vmatprep.subr.mxu0 0.0
    %2016 = vmatpush2.msra.mxu0 0.0
    %2017 = vmatprep.subr.mxu0 0.0
    %2018 = vmatpush2.msra.mxu0 0.0
    %2019 = vmatprep.subr.mxu0 0.0
    %2020 = vmatpush2.msra.mxu0 0.0
    %2021 = vmatprep.mubr.f32.mxu0 0.0
    %2022 = vmatmul.mubr.f32.gmra.mxu0 %v781
    %v2023 = vpop.f32.mrf.mxu0
    %v2024 = vadd.f32 0.0, %v2023
    %v2025 = vpop.f32.mrf.mxu0
    %v2026 = vadd.f32 0.0, %v2025
    %2027 = vmatprep.mubr.f32.mxu0 0.0
    %2028 = vmatmul.mubr.f32.gmra.mxu0 %v784
    %v2029 = vpop.f32.mrf.mxu0
    %v2030 = vadd.f32 0.0, %v2029
    %v2031 = vpop.f32.mrf.mxu0
    %v2032 = vadd.f32 0.0, %v2031
    %2033 = vdwg.mxu0
    %2034 = vmatprep.subr.mxu0 0.0
    %2035 = vmatpush1.msra.mxu0 0.0
    %2036 = vmatprep.subr.mxu0 0.0
    %2037 = vmatpush1.msra.mxu0 0.0
    %2038 = vmatprep.subr.mxu0 0.0
    %2039 = vmatpush1.msra.mxu0 0.0
    %2040 = vmatprep.subr.mxu0 0.0
    %2041 = vmatpush1.msra.mxu0 0.0
    %2042 = vmatprep.subr.mxu0 0.0
    %2043 = vmatpush1.msra.mxu0 0.0
    %2044 = vmatprep.subr.mxu0 0.0
    %2045 = vmatpush1.msra.mxu0 0.0
    %2046 = vmatprep.subr.mxu0 0.0
    %2047 = vmatpush1.msra.mxu0 0.0
    %2048 = vmatprep.subr.mxu0 0.0
    %2049 = vmatpush1.msra.mxu0 0.0
    %2050 = vmatprep.subr.mxu0 0.0
    %2051 = vmatpush1.msra.mxu0 0.0
    %2052 = vmatprep.subr.mxu0 0.0
    %2053 = vmatpush1.msra.mxu0 0.0
    %2054 = vmatprep.subr.mxu0 0.0
    %2055 = vmatpush1.msra.mxu0 0.0
    %2056 = vmatprep.subr.mxu0 0.0
    %2057 = vmatpush1.msra.mxu0 0.0
    %2058 = vmatprep.subr.mxu0 0.0
    %2059 = vmatpush1.msra.mxu0 0.0
    %2060 = vmatprep.subr.mxu0 0.0
    %2061 = vmatpush1.msra.mxu0 0.0
    %2062 = vmatprep.subr.mxu0 0.0
    %2063 = vmatpush1.msra.mxu0 %v1757
    %2064 = vmatprep.subr.mxu0 0.0
    %2065 = vmatpush1.msra.mxu0 %v1751
    %2066 = vmatprep.subr.mxu0 0.0
    %2067 = vmatpush2.msra.mxu0 0.0
    %2068 = vmatprep.subr.mxu0 0.0
    %2069 = vmatpush2.msra.mxu0 0.0
    %2070 = vmatprep.subr.mxu0 0.0
    %2071 = vmatpush2.msra.mxu0 0.0
    %2072 = vmatprep.subr.mxu0 0.0
    %2073 = vmatpush2.msra.mxu0 0.0
    %2074 = vmatprep.subr.mxu0 0.0
    %2075 = vmatpush2.msra.mxu0 0.0
    %2076 = vmatprep.subr.mxu0 0.0
    %2077 = vmatpush2.msra.mxu0 0.0
    %2078 = vmatprep.subr.mxu0 0.0
    %2079 = vmatpush2.msra.mxu0 0.0
    %2080 = vmatprep.subr.mxu0 0.0
    %2081 = vmatpush2.msra.mxu0 0.0
    %2082 = vmatprep.subr.mxu0 0.0
    %2083 = vmatpush2.msra.mxu0 0.0
    %2084 = vmatprep.subr.mxu0 0.0
    %2085 = vmatpush2.msra.mxu0 0.0
    %2086 = vmatprep.subr.mxu0 0.0
    %2087 = vmatpush2.msra.mxu0 0.0
    %2088 = vmatprep.subr.mxu0 0.0
    %2089 = vmatpush2.msra.mxu0 0.0
    %2090 = vmatprep.subr.mxu0 0.0
    %2091 = vmatpush2.msra.mxu0 0.0
    %2092 = vmatprep.subr.mxu0 0.0
    %2093 = vmatpush2.msra.mxu0 0.0
    %2094 = vmatprep.subr.mxu0 0.0
    %2095 = vmatpush2.msra.mxu0 0.0
    %2096 = vmatprep.subr.mxu0 0.0
    %2097 = vmatpush2.msra.mxu0 0.0
    %2098 = vmatprep.mubr.f32.mxu0 0.0
    %2099 = vmatmul.mubr.f32.gmra.mxu0 %v781
    %v2100 = vpop.f32.mrf.mxu0
    %v2101 = vadd.f32 0.0, %v2100
    %v2102 = vpop.f32.mrf.mxu0
    %2103 = vmatprep.mubr.f32.mxu0 0.0
    %2104 = vmatmul.mubr.f32.gmra.mxu0 %v784
    %v2105 = vpop.f32.mrf.mxu0
    %v2106 = vadd.f32 0.0, %v2105
    %v2107 = vpop.f32.mrf.mxu0
    %2108 = vdwg.mxu0
    %2109 = vmatprep.subr.mxu0 0.0
    %2110 = vmatpush1.msra.mxu0 0.0
    %2111 = vmatprep.subr.mxu0 0.0
    %2112 = vmatpush1.msra.mxu0 0.0
    %2113 = vmatprep.subr.mxu0 0.0
    %2114 = vmatpush1.msra.mxu0 0.0
    %2115 = vmatprep.subr.mxu0 0.0
    %2116 = vmatpush1.msra.mxu0 0.0
    %2117 = vmatprep.subr.mxu0 0.0
    %2118 = vmatpush1.msra.mxu0 0.0
    %2119 = vmatprep.subr.mxu0 0.0
    %2120 = vmatpush1.msra.mxu0 0.0
    %2121 = vmatprep.subr.mxu0 0.0
    %2122 = vmatpush1.msra.mxu0 0.0
    %2123 = vmatprep.subr.mxu0 0.0
    %2124 = vmatpush1.msra.mxu0 0.0
    %2125 = vmatprep.subr.mxu0 0.0
    %2126 = vmatpush1.msra.mxu0 0.0
    %2127 = vmatprep.subr.mxu0 0.0
    %2128 = vmatpush1.msra.mxu0 0.0
    %2129 = vmatprep.subr.mxu0 0.0
    %2130 = vmatpush1.msra.mxu0 0.0
    %2131 = vmatprep.subr.mxu0 0.0
    %2132 = vmatpush1.msra.mxu0 0.0
    %2133 = vmatprep.subr.mxu0 0.0
    %2134 = vmatpush1.msra.mxu0 0.0
    %2135 = vmatprep.subr.mxu0 0.0
    %2136 = vmatpush1.msra.mxu0 0.0
    %2137 = vmatprep.subr.mxu0 %v1767
    %2138 = vmatpush1.msra.mxu0 %v1680
    %2139 = vmatprep.subr.mxu0 %v1761
    %2140 = vmatpush1.msra.mxu0 %v1674
    %2141 = vmatprep.subr.mxu0 0.0
    %2142 = vmatpush2.msra.mxu0 0.0
    %2143 = vmatprep.subr.mxu0 0.0
    %2144 = vmatpush2.msra.mxu0 0.0
    %2145 = vmatprep.subr.mxu0 0.0
    %2146 = vmatpush2.msra.mxu0 0.0
    %2147 = vmatprep.subr.mxu0 0.0
    %2148 = vmatpush2.msra.mxu0 0.0
    %2149 = vmatprep.subr.mxu0 0.0
    %2150 = vmatpush2.msra.mxu0 0.0
    %2151 = vmatprep.subr.mxu0 0.0
    %2152 = vmatpush2.msra.mxu0 0.0
    %2153 = vmatprep.subr.mxu0 0.0
    %2154 = vmatpush2.msra.mxu0 0.0
    %2155 = vmatprep.subr.mxu0 0.0
    %2156 = vmatpush2.msra.mxu0 0.0
    %2157 = vmatprep.subr.mxu0 0.0
    %2158 = vmatpush2.msra.mxu0 0.0
    %2159 = vmatprep.subr.mxu0 0.0
    %2160 = vmatpush2.msra.mxu0 0.0
    %2161 = vmatprep.subr.mxu0 0.0
    %2162 = vmatpush2.msra.mxu0 0.0
    %2163 = vmatprep.subr.mxu0 0.0
    %2164 = vmatpush2.msra.mxu0 0.0
    %2165 = vmatprep.subr.mxu0 0.0
    %2166 = vmatpush2.msra.mxu0 0.0
    %2167 = vmatprep.subr.mxu0 0.0
    %2168 = vmatpush2.msra.mxu0 0.0
    %2169 = vmatprep.subr.mxu0 0.0
    %2170 = vmatpush2.msra.mxu0 0.0
    %2171 = vmatprep.subr.mxu0 0.0
    %2172 = vmatpush2.msra.mxu0 0.0
    %2173 = vmatprep.mubr.f32.mxu0 0.0
    %2174 = vmatmul.mubr.f32.gmra.mxu0 %v939
    %v2175 = vpop.f32.mrf.mxu0
    %v2176 = vadd.f32 0.0, %v2175
    %v2177 = vpop.f32.mrf.mxu0
    %v2178 = vadd.f32 0.0, %v2177
    %2179 = vmatprep.mubr.f32.mxu0 0.0
    %2180 = vmatmul.mubr.f32.gmra.mxu0 %v942
    %v2181 = vpop.f32.mrf.mxu0
    %v2182 = vadd.f32 0.0, %v2181
    %v2183 = vpop.f32.mrf.mxu0
    %v2184 = vadd.f32 0.0, %v2183
    %2185 = vdwg.mxu0
    %2186 = vmatprep.subr.mxu0 0.0
    %2187 = vmatpush1.msra.mxu0 0.0
    %2188 = vmatprep.subr.mxu0 0.0
    %2189 = vmatpush1.msra.mxu0 0.0
    %2190 = vmatprep.subr.mxu0 0.0
    %2191 = vmatpush1.msra.mxu0 0.0
    %2192 = vmatprep.subr.mxu0 0.0
    %2193 = vmatpush1.msra.mxu0 0.0
    %2194 = vmatprep.subr.mxu0 0.0
    %2195 = vmatpush1.msra.mxu0 0.0
    %2196 = vmatprep.subr.mxu0 0.0
    %2197 = vmatpush1.msra.mxu0 0.0
    %2198 = vmatprep.subr.mxu0 0.0
    %2199 = vmatpush1.msra.mxu0 0.0
    %2200 = vmatprep.subr.mxu0 0.0
    %2201 = vmatpush1.msra.mxu0 0.0
    %2202 = vmatprep.subr.mxu0 0.0
    %2203 = vmatpush1.msra.mxu0 0.0
    %2204 = vmatprep.subr.mxu0 0.0
    %2205 = vmatpush1.msra.mxu0 0.0
    %2206 = vmatprep.subr.mxu0 0.0
    %2207 = vmatpush1.msra.mxu0 0.0
    %2208 = vmatprep.subr.mxu0 0.0
    %2209 = vmatpush1.msra.mxu0 0.0
    %2210 = vmatprep.subr.mxu0 0.0
    %2211 = vmatpush1.msra.mxu0 0.0
    %2212 = vmatprep.subr.mxu0 0.0
    %2213 = vmatpush1.msra.mxu0 0.0
    %2214 = vmatprep.subr.mxu0 0.0
    %2215 = vmatpush1.msra.mxu0 %v1769
    %2216 = vmatprep.subr.mxu0 0.0
    %2217 = vmatpush1.msra.mxu0 %v1763
    %2218 = vmatprep.subr.mxu0 0.0
    %2219 = vmatpush2.msra.mxu0 0.0
    %2220 = vmatprep.subr.mxu0 0.0
    %2221 = vmatpush2.msra.mxu0 0.0
    %2222 = vmatprep.subr.mxu0 0.0
    %2223 = vmatpush2.msra.mxu0 0.0
    %2224 = vmatprep.subr.mxu0 0.0
    %2225 = vmatpush2.msra.mxu0 0.0
    %2226 = vmatprep.subr.mxu0 0.0
    %2227 = vmatpush2.msra.mxu0 0.0
    %2228 = vmatprep.subr.mxu0 0.0
    %2229 = vmatpush2.msra.mxu0 0.0
    %2230 = vmatprep.subr.mxu0 0.0
    %2231 = vmatpush2.msra.mxu0 0.0
    %2232 = vmatprep.subr.mxu0 0.0
    %2233 = vmatpush2.msra.mxu0 0.0
    %2234 = vmatprep.subr.mxu0 0.0
    %2235 = vmatpush2.msra.mxu0 0.0
    %2236 = vmatprep.subr.mxu0 0.0
    %2237 = vmatpush2.msra.mxu0 0.0
    %2238 = vmatprep.subr.mxu0 0.0
    %2239 = vmatpush2.msra.mxu0 0.0
    %2240 = vmatprep.subr.mxu0 0.0
    %2241 = vmatpush2.msra.mxu0 0.0
    %2242 = vmatprep.subr.mxu0 0.0
    %2243 = vmatpush2.msra.mxu0 0.0
    %2244 = vmatprep.subr.mxu0 0.0
    %2245 = vmatpush2.msra.mxu0 0.0
    %2246 = vmatprep.subr.mxu0 0.0
    %2247 = vmatpush2.msra.mxu0 0.0
    %2248 = vmatprep.subr.mxu0 0.0
    %2249 = vmatpush2.msra.mxu0 0.0
    %2250 = vmatprep.mubr.f32.mxu0 0.0
    %2251 = vmatmul.mubr.f32.gmra.mxu0 %v939
    %v2252 = vpop.f32.mrf.mxu0
    %v2253 = vadd.f32 0.0, %v2252
    %v2254 = vpop.f32.mrf.mxu0
    %2255 = vmatprep.mubr.f32.mxu0 0.0
    %2256 = vmatmul.mubr.f32.gmra.mxu0 %v942
    %v2257 = vpop.f32.mrf.mxu0
    %v2258 = vadd.f32 0.0, %v2257
    %v2259 = vpop.f32.mrf.mxu0
    %2260 = vdwg.mxu0
    %2261 = vmatprep.subr.mxu0 0.0
    %2262 = vmatpush1.msra.mxu0 0.0
    %2263 = vmatprep.subr.mxu0 0.0
    %2264 = vmatpush1.msra.mxu0 0.0
    %2265 = vmatprep.subr.mxu0 0.0
    %2266 = vmatpush1.msra.mxu0 0.0
    %2267 = vmatprep.subr.mxu0 0.0
    %2268 = vmatpush1.msra.mxu0 0.0
    %2269 = vmatprep.subr.mxu0 0.0
    %2270 = vmatpush1.msra.mxu0 0.0
    %2271 = vmatprep.subr.mxu0 0.0
    %2272 = vmatpush1.msra.mxu0 0.0
    %2273 = vmatprep.subr.mxu0 0.0
    %2274 = vmatpush1.msra.mxu0 0.0
    %2275 = vmatprep.subr.mxu0 0.0
    %2276 = vmatpush1.msra.mxu0 0.0
    %2277 = vmatprep.subr.mxu0 0.0
    %2278 = vmatpush1.msra.mxu0 0.0
    %2279 = vmatprep.subr.mxu0 0.0
    %2280 = vmatpush1.msra.mxu0 0.0
    %2281 = vmatprep.subr.mxu0 0.0
    %2282 = vmatpush1.msra.mxu0 0.0
    %2283 = vmatprep.subr.mxu0 0.0
    %2284 = vmatpush1.msra.mxu0 0.0
    %2285 = vmatprep.subr.mxu0 0.0
    %2286 = vmatpush1.msra.mxu0 0.0
    %2287 = vmatprep.subr.mxu0 0.0
    %2288 = vmatpush1.msra.mxu0 0.0
    %2289 = vmatprep.subr.mxu0 %v1579
    %2290 = vmatpush1.msra.mxu0 %v1577
    %2291 = vmatprep.subr.mxu0 %v1573
    %2292 = vmatpush1.msra.mxu0 %v1571
    %2293 = vmatprep.subr.mxu0 0.0
    %2294 = vmatpush2.msra.mxu0 0.0
    %2295 = vmatprep.subr.mxu0 0.0
    %2296 = vmatpush2.msra.mxu0 0.0
    %2297 = vmatprep.subr.mxu0 0.0
    %2298 = vmatpush2.msra.mxu0 0.0
    %2299 = vmatprep.subr.mxu0 0.0
    %2300 = vmatpush2.msra.mxu0 0.0
    %2301 = vmatprep.subr.mxu0 0.0
    %2302 = vmatpush2.msra.mxu0 0.0
    %2303 = vmatprep.subr.mxu0 0.0
    %2304 = vmatpush2.msra.mxu0 0.0
    %2305 = vmatprep.subr.mxu0 0.0
    %2306 = vmatpush2.msra.mxu0 0.0
    %2307 = vmatprep.subr.mxu0 0.0
    %2308 = vmatpush2.msra.mxu0 0.0
    %2309 = vmatprep.subr.mxu0 0.0
    %2310 = vmatpush2.msra.mxu0 0.0
    %2311 = vmatprep.subr.mxu0 0.0
    %2312 = vmatpush2.msra.mxu0 0.0
    %2313 = vmatprep.subr.mxu0 0.0
    %2314 = vmatpush2.msra.mxu0 0.0
    %2315 = vmatprep.subr.mxu0 0.0
    %2316 = vmatpush2.msra.mxu0 0.0
    %2317 = vmatprep.subr.mxu0 0.0
    %2318 = vmatpush2.msra.mxu0 0.0
    %2319 = vmatprep.subr.mxu0 0.0
    %2320 = vmatpush2.msra.mxu0 0.0
    %2321 = vmatprep.subr.mxu0 0.0
    %2322 = vmatpush2.msra.mxu0 0.0
    %2323 = vmatprep.subr.mxu0 0.0
    %2324 = vmatpush2.msra.mxu0 0.0
    %2325 = vmatprep.mubr.f32.mxu0 0.0
    %2326 = vmatmul.mubr.f32.gmra.mxu0 %v1097
    %v2327 = vpop.f32.mrf.mxu0
    %v2328 = vadd.f32 %v2024, %v2327
    %v2329 = vpop.f32.mrf.mxu0
    %v2330 = vadd.f32 %v2026, %v2329
    %2331 = vmatprep.mubr.f32.mxu0 0.0
    %2332 = vmatmul.mubr.f32.gmra.mxu0 %v1100
    %v2333 = vpop.f32.mrf.mxu0
    %v2334 = vadd.f32 %v2030, %v2333
    %v2335 = vpop.f32.mrf.mxu0
    %v2336 = vadd.f32 %v2032, %v2335
    %2337 = vdwg.mxu0
    %2338 = vmatprep.subr.mxu0 0.0
    %2339 = vmatpush1.msra.mxu0 0.0
    %2340 = vmatprep.subr.mxu0 0.0
    %2341 = vmatpush1.msra.mxu0 0.0
    %2342 = vmatprep.subr.mxu0 0.0
    %2343 = vmatpush1.msra.mxu0 0.0
    %2344 = vmatprep.subr.mxu0 0.0
    %2345 = vmatpush1.msra.mxu0 0.0
    %2346 = vmatprep.subr.mxu0 0.0
    %2347 = vmatpush1.msra.mxu0 0.0
    %2348 = vmatprep.subr.mxu0 0.0
    %2349 = vmatpush1.msra.mxu0 0.0
    %2350 = vmatprep.subr.mxu0 0.0
    %2351 = vmatpush1.msra.mxu0 0.0
    %2352 = vmatprep.subr.mxu0 0.0
    %2353 = vmatpush1.msra.mxu0 0.0
    %2354 = vmatprep.subr.mxu0 0.0
    %2355 = vmatpush1.msra.mxu0 0.0
    %2356 = vmatprep.subr.mxu0 0.0
    %2357 = vmatpush1.msra.mxu0 0.0
    %2358 = vmatprep.subr.mxu0 0.0
    %2359 = vmatpush1.msra.mxu0 0.0
    %2360 = vmatprep.subr.mxu0 0.0
    %2361 = vmatpush1.msra.mxu0 0.0
    %2362 = vmatprep.subr.mxu0 0.0
    %2363 = vmatpush1.msra.mxu0 0.0
    %2364 = vmatprep.subr.mxu0 0.0
    %2365 = vmatpush1.msra.mxu0 0.0
    %2366 = vmatprep.subr.mxu0 0.0
    %2367 = vmatpush1.msra.mxu0 %v1666
    %2368 = vmatprep.subr.mxu0 0.0
    %2369 = vmatpush1.msra.mxu0 %v1660
    %2370 = vmatprep.subr.mxu0 0.0
    %2371 = vmatpush2.msra.mxu0 0.0
    %2372 = vmatprep.subr.mxu0 0.0
    %2373 = vmatpush2.msra.mxu0 0.0
    %2374 = vmatprep.subr.mxu0 0.0
    %2375 = vmatpush2.msra.mxu0 0.0
    %2376 = vmatprep.subr.mxu0 0.0
    %2377 = vmatpush2.msra.mxu0 0.0
    %2378 = vmatprep.subr.mxu0 0.0
    %2379 = vmatpush2.msra.mxu0 0.0
    %2380 = vmatprep.subr.mxu0 0.0
    %2381 = vmatpush2.msra.mxu0 0.0
    %2382 = vmatprep.subr.mxu0 0.0
    %2383 = vmatpush2.msra.mxu0 0.0
    %2384 = vmatprep.subr.mxu0 0.0
    %2385 = vmatpush2.msra.mxu0 0.0
    %2386 = vmatprep.subr.mxu0 0.0
    %2387 = vmatpush2.msra.mxu0 0.0
    %2388 = vmatprep.subr.mxu0 0.0
    %2389 = vmatpush2.msra.mxu0 0.0
    %2390 = vmatprep.subr.mxu0 0.0
    %2391 = vmatpush2.msra.mxu0 0.0
    %2392 = vmatprep.subr.mxu0 0.0
    %2393 = vmatpush2.msra.mxu0 0.0
    %2394 = vmatprep.subr.mxu0 0.0
    %2395 = vmatpush2.msra.mxu0 0.0
    %2396 = vmatprep.subr.mxu0 0.0
    %2397 = vmatpush2.msra.mxu0 0.0
    %2398 = vmatprep.subr.mxu0 0.0
    %2399 = vmatpush2.msra.mxu0 0.0
    %2400 = vmatprep.subr.mxu0 0.0
    %2401 = vmatpush2.msra.mxu0 0.0
    %2402 = vmatprep.mubr.f32.mxu0 0.0
    %2403 = vmatmul.mubr.f32.gmra.mxu0 %v1097
    %v2404 = vpop.f32.mrf.mxu0
    %v2405 = vadd.f32 %v2101, %v2404
    %v2406 = vpop.f32.mrf.mxu0
    %2407 = vmatprep.mubr.f32.mxu0 0.0
    %2408 = vmatmul.mubr.f32.gmra.mxu0 %v1100
    %v2409 = vpop.f32.mrf.mxu0
    %v2410 = vadd.f32 %v2106, %v2409
    %v2411 = vpop.f32.mrf.mxu0
    %2412 = vdwg.mxu0
    %2413 = vmatprep.subr.mxu0 0.0
    %2414 = vmatpush1.msra.mxu0 0.0
    %2415 = vmatprep.subr.mxu0 0.0
    %2416 = vmatpush1.msra.mxu0 0.0
    %2417 = vmatprep.subr.mxu0 0.0
    %2418 = vmatpush1.msra.mxu0 0.0
    %2419 = vmatprep.subr.mxu0 0.0
    %2420 = vmatpush1.msra.mxu0 0.0
    %2421 = vmatprep.subr.mxu0 0.0
    %2422 = vmatpush1.msra.mxu0 0.0
    %2423 = vmatprep.subr.mxu0 0.0
    %2424 = vmatpush1.msra.mxu0 0.0
    %2425 = vmatprep.subr.mxu0 0.0
    %2426 = vmatpush1.msra.mxu0 0.0
    %2427 = vmatprep.subr.mxu0 0.0
    %2428 = vmatpush1.msra.mxu0 0.0
    %2429 = vmatprep.subr.mxu0 0.0
    %2430 = vmatpush1.msra.mxu0 0.0
    %2431 = vmatprep.subr.mxu0 0.0
    %2432 = vmatpush1.msra.mxu0 0.0
    %2433 = vmatprep.subr.mxu0 0.0
    %2434 = vmatpush1.msra.mxu0 0.0
    %2435 = vmatprep.subr.mxu0 0.0
    %2436 = vmatpush1.msra.mxu0 0.0
    %2437 = vmatprep.subr.mxu0 0.0
    %2438 = vmatpush1.msra.mxu0 0.0
    %2439 = vmatprep.subr.mxu0 0.0
    %2440 = vmatpush1.msra.mxu0 0.0
    %2441 = vmatprep.subr.mxu0 %v1591
    %2442 = vmatpush1.msra.mxu0 %v1589
    %2443 = vmatprep.subr.mxu0 %v1585
    %2444 = vmatpush1.msra.mxu0 %v1583
    %2445 = vmatprep.subr.mxu0 0.0
    %2446 = vmatpush2.msra.mxu0 0.0
    %2447 = vmatprep.subr.mxu0 0.0
    %2448 = vmatpush2.msra.mxu0 0.0
    %2449 = vmatprep.subr.mxu0 0.0
    %2450 = vmatpush2.msra.mxu0 0.0
    %2451 = vmatprep.subr.mxu0 0.0
    %2452 = vmatpush2.msra.mxu0 0.0
    %2453 = vmatprep.subr.mxu0 0.0
    %2454 = vmatpush2.msra.mxu0 0.0
    %2455 = vmatprep.subr.mxu0 0.0
    %2456 = vmatpush2.msra.mxu0 0.0
    %2457 = vmatprep.subr.mxu0 0.0
    %2458 = vmatpush2.msra.mxu0 0.0
    %2459 = vmatprep.subr.mxu0 0.0
    %2460 = vmatpush2.msra.mxu0 0.0
    %2461 = vmatprep.subr.mxu0 0.0
    %2462 = vmatpush2.msra.mxu0 0.0
    %2463 = vmatprep.subr.mxu0 0.0
    %2464 = vmatpush2.msra.mxu0 0.0
    %2465 = vmatprep.subr.mxu0 0.0
    %2466 = vmatpush2.msra.mxu0 0.0
    %2467 = vmatprep.subr.mxu0 0.0
    %2468 = vmatpush2.msra.mxu0 0.0
    %2469 = vmatprep.subr.mxu0 0.0
    %2470 = vmatpush2.msra.mxu0 0.0
    %2471 = vmatprep.subr.mxu0 0.0
    %2472 = vmatpush2.msra.mxu0 0.0
    %2473 = vmatprep.subr.mxu0 0.0
    %2474 = vmatpush2.msra.mxu0 0.0
    %2475 = vmatprep.subr.mxu0 0.0
    %2476 = vmatpush2.msra.mxu0 0.0
    %2477 = vmatprep.mubr.f32.mxu0 0.0
    %2478 = vmatmul.mubr.f32.gmra.mxu0 %v1255
    %v2479 = vpop.f32.mrf.mxu0
    %v2480 = vadd.f32 %v2176, %v2479
    %v2481 = vpop.f32.mrf.mxu0
    %v2482 = vadd.f32 %v2178, %v2481
    %2483 = vmatprep.mubr.f32.mxu0 0.0
    %2484 = vmatmul.mubr.f32.gmra.mxu0 %v1258
    %v2485 = vpop.f32.mrf.mxu0
    %v2486 = vadd.f32 %v2182, %v2485
    %v2487 = vpop.f32.mrf.mxu0
    %v2488 = vadd.f32 %v2184, %v2487
    %2489 = vdwg.mxu0
    %2490 = vmatprep.subr.mxu0 0.0
    %2491 = vmatpush1.msra.mxu0 0.0
    %2492 = vmatprep.subr.mxu0 0.0
    %2493 = vmatpush1.msra.mxu0 0.0
    %2494 = vmatprep.subr.mxu0 0.0
    %2495 = vmatpush1.msra.mxu0 0.0
    %2496 = vmatprep.subr.mxu0 0.0
    %2497 = vmatpush1.msra.mxu0 0.0
    %2498 = vmatprep.subr.mxu0 0.0
    %2499 = vmatpush1.msra.mxu0 0.0
    %2500 = vmatprep.subr.mxu0 0.0
    %2501 = vmatpush1.msra.mxu0 0.0
    %2502 = vmatprep.subr.mxu0 0.0
    %2503 = vmatpush1.msra.mxu0 0.0
    %2504 = vmatprep.subr.mxu0 0.0
    %2505 = vmatpush1.msra.mxu0 0.0
    %2506 = vmatprep.subr.mxu0 0.0
    %2507 = vmatpush1.msra.mxu0 0.0
    %2508 = vmatprep.subr.mxu0 0.0
    %2509 = vmatpush1.msra.mxu0 0.0
    %2510 = vmatprep.subr.mxu0 0.0
    %2511 = vmatpush1.msra.mxu0 0.0
    %2512 = vmatprep.subr.mxu0 0.0
    %2513 = vmatpush1.msra.mxu0 0.0
    %2514 = vmatprep.subr.mxu0 0.0
    %2515 = vmatpush1.msra.mxu0 0.0
    %2516 = vmatprep.subr.mxu0 0.0
    %2517 = vmatpush1.msra.mxu0 0.0
    %2518 = vmatprep.subr.mxu0 0.0
    %2519 = vmatpush1.msra.mxu0 %v1678
    %2520 = vmatprep.subr.mxu0 0.0
    %2521 = vmatpush1.msra.mxu0 %v1672
    %2522 = vmatprep.subr.mxu0 0.0
    %2523 = vmatpush2.msra.mxu0 0.0
    %2524 = vmatprep.subr.mxu0 0.0
    %2525 = vmatpush2.msra.mxu0 0.0
    %2526 = vmatprep.subr.mxu0 0.0
    %2527 = vmatpush2.msra.mxu0 0.0
    %2528 = vmatprep.subr.mxu0 0.0
    %2529 = vmatpush2.msra.mxu0 0.0
    %2530 = vmatprep.subr.mxu0 0.0
    %2531 = vmatpush2.msra.mxu0 0.0
    %2532 = vmatprep.subr.mxu0 0.0
    %2533 = vmatpush2.msra.mxu0 0.0
    %2534 = vmatprep.subr.mxu0 0.0
    %2535 = vmatpush2.msra.mxu0 0.0
    %2536 = vmatprep.subr.mxu0 0.0
    %2537 = vmatpush2.msra.mxu0 0.0
    %2538 = vmatprep.subr.mxu0 0.0
    %2539 = vmatpush2.msra.mxu0 0.0
    %2540 = vmatprep.subr.mxu0 0.0
    %2541 = vmatpush2.msra.mxu0 0.0
    %2542 = vmatprep.subr.mxu0 0.0
    %2543 = vmatpush2.msra.mxu0 0.0
    %2544 = vmatprep.subr.mxu0 0.0
    %2545 = vmatpush2.msra.mxu0 0.0
    %2546 = vmatprep.subr.mxu0 0.0
    %2547 = vmatpush2.msra.mxu0 0.0
    %2548 = vmatprep.subr.mxu0 0.0
    %2549 = vmatpush2.msra.mxu0 0.0
    %2550 = vmatprep.subr.mxu0 0.0
    %2551 = vmatpush2.msra.mxu0 0.0
    %2552 = vmatprep.subr.mxu0 0.0
    %2553 = vmatpush2.msra.mxu0 0.0
    %2554 = vmatprep.mubr.f32.mxu0 0.0
    %2555 = vmatmul.mubr.f32.gmra.mxu0 %v1255
    %v2556 = vpop.f32.mrf.mxu0
    %v2557 = vadd.f32 %v2253, %v2556
    %v2558 = vpop.f32.mrf.mxu0
    %2559 = vmatprep.mubr.f32.mxu0 0.0
    %2560 = vmatmul.mubr.f32.gmra.mxu0 %v1258
    %v2561 = vpop.f32.mrf.mxu0
    %v2562 = vadd.f32 %v2258, %v2561
    %v2563 = vpop.f32.mrf.mxu0
    %2564 = vdwg.mxu0
    %v2565 = vadd.f32 %v2328, %v294
    %v2566 = vadd.f32 %v2330, %v295
    %v2567 = vadd.f32 %v2405, %v296
    %v2568 = vadd.f32 %v2334, %v297
    %v2569 = vadd.f32 %v2336, %v298
    %v2570 = vadd.f32 %v2410, %v299
    %v2571 = vadd.f32 %v2480, %v300
    %v2572 = vadd.f32 %v2482, %v301
    %v2573 = vadd.f32 %v2557, %v302
    %v2574 = vadd.f32 %v2486, %v303
    %v2575 = vadd.f32 %v2488, %v304
    %v2576 = vadd.f32 %v2562, %v305
    %v2577 = vadd.f32 %v2565, %v1945
    %v2578 = vadd.f32 %v2568, %v1948
    %v2579 = vadd.f32 %v2571, %v1951
    %v2580 = vadd.f32 %v2574, %v1954
    %v2581 = vxor.u32 %v2577, 2147483648
    %v2582 = vxor.u32 %v2578, 2147483648
    %v2583 = vxor.u32 %v2579, 2147483648
    %v2584 = vxor.u32 %v2580, 2147483648
    %v2585 = vmul.f32 %v2581, 1.442695
    %v2586 = vpow.pop %v2585
    %v2587 = vmul.f32 %v2582, 1.442695
    %v2588 = vpow.pop %v2587
    %v2589 = vmul.f32 %v2583, 1.442695
    %v2590 = vpow.pop %v2589
    %v2591 = vmul.f32 %v2584, 1.442695
    %v2592 = vpow.pop %v2591
    %v2593 = vadd.f32 %v2586, 1.0
    %v2594 = vadd.f32 %v2588, 1.0
    %v2595 = vadd.f32 %v2590, 1.0
    %v2596 = vadd.f32 %v2592, 1.0
    %v2597 = vrcp.pop %v2593
    %v2598 = vmul.f32 1.0, %v2597
    %v2599 = vrcp.pop %v2594
    %v2600 = vmul.f32 1.0, %v2599
    %v2601 = vrcp.pop %v2595
    %v2602 = vmul.f32 1.0, %v2601
    %v2603 = vrcp.pop %v2596
    %v2604 = vmul.f32 1.0, %v2603
    %v2605 = vadd.f32 %v2566, %v1946
    %v2606 = vadd.f32 %v2569, %v1949
    %v2607 = vadd.f32 %v2572, %v1952
    %v2608 = vadd.f32 %v2575, %v1955
    %v2609 = vxor.u32 %v2605, 2147483648
    %v2610 = vxor.u32 %v2606, 2147483648
    %v2611 = vxor.u32 %v2607, 2147483648
    %v2612 = vxor.u32 %v2608, 2147483648
    %v2613 = vmul.f32 %v2609, 1.442695
    %v2614 = vpow.pop %v2613
    %v2615 = vmul.f32 %v2610, 1.442695
    %v2616 = vpow.pop %v2615
    %v2617 = vmul.f32 %v2611, 1.442695
    %v2618 = vpow.pop %v2617
    %v2619 = vmul.f32 %v2612, 1.442695
    %v2620 = vpow.pop %v2619
    %v2621 = vadd.f32 %v2614, 1.0
    %v2622 = vadd.f32 %v2616, 1.0
    %v2623 = vadd.f32 %v2618, 1.0
    %v2624 = vadd.f32 %v2620, 1.0
    %v2625 = vrcp.pop %v2621
    %v2626 = vmul.f32 1.0, %v2625
    %v2627 = vrcp.pop %v2622
    %v2628 = vmul.f32 1.0, %v2627
    %v2629 = vrcp.pop %v2623
    %v2630 = vmul.f32 1.0, %v2629
    %v2631 = vrcp.pop %v2624
    %v2632 = vmul.f32 1.0, %v2631
    %v2633 = vmul.f32 %v2598, %v1947
    %v2634 = vmul.f32 %v2600, %v1950
    %v2635 = vmul.f32 %v2602, %v1953
    %v2636 = vmul.f32 %v2604, %v1956
    %v2637 = vadd.f32 %v2567, %v2633
    %v2638 = vadd.f32 %v2570, %v2634
    %v2639 = vadd.f32 %v2573, %v2635
    %v2640 = vadd.f32 %v2576, %v2636
    %v2641 = vtanh.pop %v2637
    %v2642 = vtanh.pop %v2638
    %v2643 = vtanh.pop %v2639
    %v2644 = vtanh.pop %v2640
    %v2645 = vsub.f32 %v1500, %v2641
    %v2646 = vsub.f32 %v1501, %v2642
    %v2647 = vsub.f32 %v1502, %v2643
    %v2648 = vsub.f32 %v1503, %v2644
    %v2649 = vmul.f32 %v2626, %v2645
    %v2650 = vmul.f32 %v2628, %v2646
    %v2651 = vmul.f32 %v2630, %v2647
    %v2652 = vmul.f32 %v2632, %v2648
    %v2653 = vadd.f32 %v2641, %v2649
    %v2654 = vadd.f32 %v2642, %v2650
    %v2655 = vadd.f32 %v2643, %v2651
    %v2656 = vadd.f32 %v2644, %v2652
    %2657 = vst [vmem:[#allocation2] sm:$0xff] %v2653
    %2658 = vst [vmem:[#allocation2 + $0x8] sm:$0xff] %v2654
    %2659 = vst [vmem:[#allocation2 + $0x10] sm:$0xff] %v2655
    %2660 = vst [vmem:[#allocation2 + $0x18] sm:$0xff] %v2656
    // Predicated region
    $region34: #{gcn_gru_forward.1} parent=1 // pred_check
      _
    $region35: #{gcn_gru_forward.1} parent=1 // pred_check_branch
      %2662 = sbr.rel (0) target = $region37
    $region36: #{gcn_gru_forward.1} parent=1 // pred_region
      %s2664 = ssub.s32 512, 512
      %2665 = vsyncadd [#allocation3], %s2664
      %s2666 = sshll.u32 [#allocation2], 4
      %s2667 = int_to_ptr.vmem [resolvable:$true] %s2666
      %2672 = dma.vmem_to_hbm [thread:$0]  %s2667, 512, %s8, [#allocation3], 128, 128, 8
    $region37: #{gcn_gru_forward.1} parent=1 // pred_fallthru
      _
    // Predicated region
    $region38: #{gcn_gru_forward.1} parent=1 // pred_check
      _
    $region39: #{gcn_gru_forward.1} parent=1 // pred_check_branch
      %2674 = sbr.rel (0) target = $region41
    $region40: #{gcn_gru_forward.1} parent=1 // pred_region
      %2675 = dma.done [#allocation3], 512
    $region41: #{gcn_gru_forward.1} parent=1 // pred_fallthru
      _
    %2676 = vsyncpa [#allocation3], 1

</llo_original>
